<compile_context>
chip_gen: v6e
topology: v6e:2x2x1
jax: 0.10.0
libtpu: 0.0.40
codegen_flags: <defaults>
</compile_context>

<pallas_src>
import functools

import numpy as np
import jax
import jax.numpy as jnp
from jax.experimental import pallas as pl
from jax.experimental.pallas import tpu as pltpu


# ----------------------------------------------------------------------------
# Glue: 1-D adaptive-avg-pool and bilinear-resize (align_corners=False)
# matrices matching PyTorch semantics exactly.
# ----------------------------------------------------------------------------
def _adaptive_avg_pool_matrix(L, s):
    """(s, L) matrix implementing nn.AdaptiveAvgPool along one axis: L -> s."""
    P = np.zeros((s, L), dtype=np.float32)
    for i in range(s):
        start = (i * L) // s
        end = -((-(i + 1) * L) // s)  # ceil((i+1)*L/s)
        P[i, start:end] = 1.0 / (end - start)
    return P


def _bilinear_resize_matrix(s, L):
    """(L, s) matrix implementing F.interpolate(mode='bilinear',
    align_corners=False) along one axis: s -> L."""
    U = np.zeros((L, s), dtype=np.float32)
    scale = s / L
    for o in range(L):
        src = (o + 0.5) * scale - 0.5
        if src < 0.0:
            src = 0.0
        i0 = min(int(np.floor(src)), s - 1)
        i1 = min(i0 + 1, s - 1)
        frac = src - i0
        U[o, i0] += 1.0 - frac
        U[o, i1] += frac
    return U


# ----------------------------------------------------------------------------
# Pallas kernel: one batch element per grid step; all B branches in-kernel.
# ----------------------------------------------------------------------------
def _ppm_kernel(x_ref, pt_ref, w_ref, ut_ref, bias_ref, out_ref, *, C, K, B):
    # x_ref:    (1, C, HW)   f32   input features (channels-first, flat spatial)
    # pt_ref:   (B, HW, S2)  bf16  transposed pooling operators (zero padded)
    # w_ref:    (B, K, C)    bf16  1x1 conv weight with BN scale folded in
    # ut_ref:   (B, S2, HW)  bf16  transposed bilinear-upsample operators
    # bias_ref: (B, K, 1)    f32   folded BatchNorm bias
    # out_ref:  (1, C+B*K, HW) f32
    x = x_ref[0]                                   # (C, HW) f32
    out_ref[0, 0:C, :] = x                         # identity passthrough
    xb = x.astype(jnp.bfloat16)
    for b in range(B):                             # static unroll over branches
        pooled = jnp.dot(xb, pt_ref[b],
                         preferred_element_type=jnp.float32)          # (C, S2)
        conv = jnp.dot(w_ref[b], pooled.astype(jnp.bfloat16),
                       preferred_element_type=jnp.float32)            # (K, S2)
        up = jnp.dot(conv.astype(jnp.bfloat16), ut_ref[b],
                     preferred_element_type=jnp.float32)              # (K, HW)
        y = jnp.maximum(up + bias_ref[b], 0.0)                        # BN bias + ReLU
        out_ref[0, C + b * K:C + (b + 1) * K, :] = y.astype(out_ref.dtype)


def pyramidal_pooling(x_nchw, pt_all, w_all, ut_all, bias_all):
    """Forward of PyramidalPooling. Returns (N, C + B*K, H, W)."""
    N, C, H, W = x_nchw.shape
    B, K, _ = w_all.shape
    HW = H * W
    S2 = pt_all.shape[-1]
    Cout = C + B * K

    x_flat = x_nchw.reshape(N, C, HW)              # free reshape (NCHW row-major)

    kernel = functools.partial(_ppm_kernel, C=C, K=K, B=B)

    out_flat = pl.pallas_call(
        kernel,
        out_shape=jax.ShapeDtypeStruct((N, Cout, HW), x_nchw.dtype),
        grid_spec=pltpu.PrefetchScalarGridSpec(
            num_scalar_prefetch=0,
            grid=(N,),
            in_specs=[
                pl.BlockSpec((1, C, HW), lambda n: (n, 0, 0)),
                pl.BlockSpec((B, HW, S2), lambda n: (0, 0, 0)),
                pl.BlockSpec((B, K, C), lambda n: (0, 0, 0)),
                pl.BlockSpec((B, S2, HW), lambda n: (0, 0, 0)),
                pl.BlockSpec((B, K, 1), lambda n: (0, 0, 0)),
            ],
            out_specs=pl.BlockSpec((1, Cout, HW), lambda n: (n, 0, 0)),
        ),
        compiler_params=pltpu.CompilerParams(
            dimension_semantics=("parallel",)),
    )(x_flat, pt_all, w_all, ut_all, bias_all)

    return out_flat.reshape(N, Cout, H, W)         # free reshape


if __name__ == "__main__":
    # Small shapes consistent with PyramidalPooling(fc_dim, pool_scales=(1,2,3,6)).
    N, C, H, W = 2, 32, 12, 12     # fc_dim=2048 -> 32 for the synthetic test
    K = 16                         # branch output channels (512 in the original)
    pool_scales = (1, 2, 3, 6)
    eps = 1e-5
    B = len(pool_scales)
    HW = H * W
    S2 = max(s * s for s in pool_scales)

    key = jax.random.PRNGKey(0)
    kx, kw, kg, kb, km, kv = jax.random.split(key, 6)

    x = jax.random.normal(kx, (N, C, H, W), dtype=jnp.float32)

    # Factored per-branch spatial operators: P (s^2, HW) pooling, U (HW, s^2)
    # bilinear upsample; stored transposed + zero-padded to S2 for a static kernel.
    pt_list, ut_list, m_list = [], [], []
    for s in pool_scales:
        P = np.kron(_adaptive_avg_pool_matrix(H, s),
                    _adaptive_avg_pool_matrix(W, s))       # (s^2, HW)
        U = np.kron(_bilinear_resize_matrix(s, H),
                    _bilinear_resize_matrix(s, W))         # (HW, s^2)
        Pt = np.zeros((HW, S2), np.float32); Pt[:, :s * s] = P.T
        Ut = np.zeros((S2, HW), np.float32); Ut[:s * s, :] = U.T
        pt_list.append(Pt)
        ut_list.append(Ut)
        m_list.append(U @ P)                               # (HW, HW), reference only
    pt_all = jnp.asarray(np.stack(pt_list), dtype=jnp.bfloat16)   # (B, HW, S2)
    ut_all = jnp.asarray(np.stack(ut_list), dtype=jnp.bfloat16)   # (B, S2, HW)

    # Conv2d(C, K, 1, bias=False) weights + BatchNorm2d(K) params per branch.
    conv_w = 0.05 * jax.random.normal(kw, (B, K, C), dtype=jnp.float32)
    gamma = 1.0 + 0.1 * jax.random.normal(kg, (B, K), dtype=jnp.float32)
    beta = 0.1 * jax.random.normal(kb, (B, K), dtype=jnp.float32)
    run_mean = 0.1 * jax.random.normal(km, (B, K), dtype=jnp.float32)
    run_var = 1.0 + jax.nn.softplus(jax.random.normal(kv, (B, K))).astype(jnp.float32)

    # Fold BN (inference-mode) into the conv weight / a bias.
    scale = gamma / jnp.sqrt(run_var + eps)                 # (B, K)
    bias = beta - run_mean * scale                          # (B, K)
    w_all = (conv_w * scale[:, :, None]).astype(jnp.bfloat16)   # (B, K, C)
    bias_all = bias[:, :, None].astype(jnp.float32)             # (B, K, 1)

    out = pyramidal_pooling(x, pt_all, w_all, ut_all, bias_all)
    out = jax.block_until_ready(out)

    # Shape / sanity checks + pure-f32 JAX reference mirroring the original op
    # order (pool -> bilinear upsample -> conv -> BN -> ReLU); tolerance covers
    # bf16 matmul operands with f32 accumulation.
    assert out.shape == (N, C + B * K, H, W), out.shape
    x_flat_ref = x.reshape(N, C, HW)
    outs_ref = [x]
    for b in range(B):
        up = jnp.einsum('pq,ncq->ncp', jnp.asarray(m_list[b]), x_flat_ref)  # (N,C,HW)
        yc = jnp.einsum('kc,ncp->nkp', conv_w[b], up)                       # (N,K,HW)
        yb = yc * scale[b][None, :, None] + bias[b][None, :, None]
        outs_ref.append(jnp.maximum(yb, 0.0).reshape(N, K, H, W))
    ref = jnp.concatenate(outs_ref, axis=1)
    assert bool(jnp.all(jnp.isfinite(out)))
    assert bool(jnp.allclose(out, ref, rtol=2e-2, atol=2e-2))
    print("KERNEL_OK")
</pallas_src>

<mosaic_0001>
module attributes {stable_mosaic.version = 11 : i64} {
  func.func @_ppm_kernel(%arg0: i32, %arg1: memref<1x32x144xf32, #tpu.memory_space<vmem>>, %arg2: memref<4x144x36xbf16, #tpu.memory_space<vmem>>, %arg3: memref<4x16x32xbf16, #tpu.memory_space<vmem>>, %arg4: memref<4x36x144xbf16, #tpu.memory_space<vmem>>, %arg5: memref<4x16x1xf32, #tpu.memory_space<vmem>>, %arg6: memref<1x96x144xf32, #tpu.memory_space<vmem>>) attributes {dimension_semantics = [#tpu.dimension_semantics<parallel>], iteration_bounds = array<i64: 2>, scalar_prefetch = 0 : i64, scratch_operands = 0 : i64, tpu.core_type = #tpu.core_type<tc>, window_params = [{transform_indices = @transform_0, window_bounds = array<i64: 1, 32, 144>}, {pipeline_mode = #tpu.pipeline_mode<synchronous>, transform_indices = @transform_1, window_bounds = array<i64: 4, 144, 36>}, {pipeline_mode = #tpu.pipeline_mode<synchronous>, transform_indices = @transform_2, window_bounds = array<i64: 4, 16, 32>}, {pipeline_mode = #tpu.pipeline_mode<synchronous>, transform_indices = @transform_3, window_bounds = array<i64: 4, 36, 144>}, {pipeline_mode = #tpu.pipeline_mode<synchronous>, transform_indices = @transform_4, window_bounds = array<i64: 4, 16, 1>}, {transform_indices = @transform_5, window_bounds = array<i64: 1, 96, 144>}]} {
    %c0 = arith.constant 0 : index
    %c0_0 = arith.constant 0 : index
    %c0_1 = arith.constant 0 : index
    %0 = vector.load %arg1[%c0, %c0_0, %c0_1] : memref<1x32x144xf32, #tpu.memory_space<vmem>>, vector<1x32x144xf32>
    %1 = vector.shape_cast %0 : vector<1x32x144xf32> to vector<32x144xf32>
    %c0_2 = arith.constant 0 : index
    %c0_3 = arith.constant 0 : index
    %c0_4 = arith.constant 0 : index
    %2 = vector.load %arg6[%c0_2, %c0_3, %c0_4] : memref<1x96x144xf32, #tpu.memory_space<vmem>>, vector<1x32x144xf32>
    %3 = vector.shape_cast %2 : vector<1x32x144xf32> to vector<32x144xf32>
    %4 = vector.shape_cast %1 : vector<32x144xf32> to vector<1x32x144xf32>
    tpu.vector_store %arg6[%c0_2, %c0_3, %c0_4], %4 {strides = array<i32>} : memref<1x96x144xf32, #tpu.memory_space<vmem>>, vector<1x32x144xf32>,
    %5 = arith.truncf %1 : vector<32x144xf32> to vector<32x144xbf16>
    %c0_5 = arith.constant 0 : index
    %c0_6 = arith.constant 0 : index
    %c0_7 = arith.constant 0 : index
    %6 = vector.load %arg2[%c0_5, %c0_6, %c0_7] : memref<4x144x36xbf16, #tpu.memory_space<vmem>>, vector<1x144x36xbf16>
    %7 = vector.shape_cast %6 : vector<1x144x36xbf16> to vector<144x36xbf16>
    %cst = arith.constant dense<0.000000e+00> : vector<32x36xf32>
    %8 = tpu.matmul %5, %7, %cst {dimension_numbers = #tpu.dot_dimension_numbers<[1], [0], [0], [1], [0, 0, 1, 1], [], []>} : vector<32x144xbf16>, vector<144x36xbf16>, vector<32x36xf32> -> vector<32x36xf32>
    %c0_8 = arith.constant 0 : index
    %c0_9 = arith.constant 0 : index
    %c0_10 = arith.constant 0 : index
    %9 = vector.load %arg3[%c0_8, %c0_9, %c0_10] : memref<4x16x32xbf16, #tpu.memory_space<vmem>>, vector<1x16x32xbf16>
    %10 = vector.shape_cast %9 : vector<1x16x32xbf16> to vector<16x32xbf16>
    %11 = arith.truncf %8 : vector<32x36xf32> to vector<32x36xbf16>
    %cst_11 = arith.constant dense<0.000000e+00> : vector<16x36xf32>
    %12 = tpu.matmul %10, %11, %cst_11 {dimension_numbers = #tpu.dot_dimension_numbers<[1], [0], [0], [1], [0, 0, 1, 1], [], []>} : vector<16x32xbf16>, vector<32x36xbf16>, vector<16x36xf32> -> vector<16x36xf32>
    %13 = arith.truncf %12 : vector<16x36xf32> to vector<16x36xbf16>
    %c0_12 = arith.constant 0 : index
    %c0_13 = arith.constant 0 : index
    %c0_14 = arith.constant 0 : index
    %14 = vector.load %arg4[%c0_12, %c0_13, %c0_14] : memref<4x36x144xbf16, #tpu.memory_space<vmem>>, vector<1x36x144xbf16>
    %15 = vector.shape_cast %14 : vector<1x36x144xbf16> to vector<36x144xbf16>
    %cst_15 = arith.constant dense<0.000000e+00> : vector<16x144xf32>
    %16 = tpu.matmul %13, %15, %cst_15 {dimension_numbers = #tpu.dot_dimension_numbers<[1], [0], [0], [1], [0, 0, 1, 1], [], []>} : vector<16x36xbf16>, vector<36x144xbf16>, vector<16x144xf32> -> vector<16x144xf32>
    %c0_16 = arith.constant 0 : index
    %c0_17 = arith.constant 0 : index
    %c0_18 = arith.constant 0 : index
    %17 = vector.load %arg5[%c0_16, %c0_17, %c0_18] : memref<4x16x1xf32, #tpu.memory_space<vmem>>, vector<1x16x1xf32>
    %18 = vector.shape_cast %17 : vector<1x16x1xf32> to vector<16x1xf32>
    %19 = vector.broadcast %18 : vector<16x1xf32> to vector<16x144xf32>
    %20 = arith.addf %16, %19 : vector<16x144xf32>
    %cst_19 = arith.constant 0.000000e+00 : f32
    %21 = vector.broadcast %cst_19 : f32 to vector<16x144xf32>
    %22 = arith.maximumf %20, %21 : vector<16x144xf32>
    %c0_20 = arith.constant 0 : index
    %c32 = arith.constant 32 : index
    %c0_21 = arith.constant 0 : index
    %23 = vector.load %arg6[%c0_20, %c32, %c0_21] : memref<1x96x144xf32, #tpu.memory_space<vmem>>, vector<1x16x144xf32>
    %24 = vector.shape_cast %23 : vector<1x16x144xf32> to vector<16x144xf32>
    %25 = vector.shape_cast %22 : vector<16x144xf32> to vector<1x16x144xf32>
    tpu.vector_store %arg6[%c0_20, %c32, %c0_21], %25 {strides = array<i32>} : memref<1x96x144xf32, #tpu.memory_space<vmem>>, vector<1x16x144xf32>,
    %c1 = arith.constant 1 : index
    %c0_22 = arith.constant 0 : index
    %c0_23 = arith.constant 0 : index
    %26 = vector.load %arg2[%c1, %c0_22, %c0_23] : memref<4x144x36xbf16, #tpu.memory_space<vmem>>, vector<1x144x36xbf16>
    %27 = vector.shape_cast %26 : vector<1x144x36xbf16> to vector<144x36xbf16>
    %cst_24 = arith.constant dense<0.000000e+00> : vector<32x36xf32>
    %28 = tpu.matmul %5, %27, %cst_24 {dimension_numbers = #tpu.dot_dimension_numbers<[1], [0], [0], [1], [0, 0, 1, 1], [], []>} : vector<32x144xbf16>, vector<144x36xbf16>, vector<32x36xf32> -> vector<32x36xf32>
    %c1_25 = arith.constant 1 : index
    %c0_26 = arith.constant 0 : index
    %c0_27 = arith.constant 0 : index
    %29 = vector.load %arg3[%c1_25, %c0_26, %c0_27] : memref<4x16x32xbf16, #tpu.memory_space<vmem>>, vector<1x16x32xbf16>
    %30 = vector.shape_cast %29 : vector<1x16x32xbf16> to vector<16x32xbf16>
    %31 = arith.truncf %28 : vector<32x36xf32> to vector<32x36xbf16>
    %cst_28 = arith.constant dense<0.000000e+00> : vector<16x36xf32>
    %32 = tpu.matmul %30, %31, %cst_28 {dimension_numbers = #tpu.dot_dimension_numbers<[1], [0], [0], [1], [0, 0, 1, 1], [], []>} : vector<16x32xbf16>, vector<32x36xbf16>, vector<16x36xf32> -> vector<16x36xf32>
    %33 = arith.truncf %32 : vector<16x36xf32> to vector<16x36xbf16>
    %c1_29 = arith.constant 1 : index
    %c0_30 = arith.constant 0 : index
    %c0_31 = arith.constant 0 : index
    %34 = vector.load %arg4[%c1_29, %c0_30, %c0_31] : memref<4x36x144xbf16, #tpu.memory_space<vmem>>, vector<1x36x144xbf16>
    %35 = vector.shape_cast %34 : vector<1x36x144xbf16> to vector<36x144xbf16>
    %cst_32 = arith.constant dense<0.000000e+00> : vector<16x144xf32>
    %36 = tpu.matmul %33, %35, %cst_32 {dimension_numbers = #tpu.dot_dimension_numbers<[1], [0], [0], [1], [0, 0, 1, 1], [], []>} : vector<16x36xbf16>, vector<36x144xbf16>, vector<16x144xf32> -> vector<16x144xf32>
    %c1_33 = arith.constant 1 : index
    %c0_34 = arith.constant 0 : index
    %c0_35 = arith.constant 0 : index
    %37 = vector.load %arg5[%c1_33, %c0_34, %c0_35] : memref<4x16x1xf32, #tpu.memory_space<vmem>>, vector<1x16x1xf32>
    %38 = vector.shape_cast %37 : vector<1x16x1xf32> to vector<16x1xf32>
    %39 = vector.broadcast %38 : vector<16x1xf32> to vector<16x144xf32>
    %40 = arith.addf %36, %39 : vector<16x144xf32>
    %cst_36 = arith.constant 0.000000e+00 : f32
    %41 = vector.broadcast %cst_36 : f32 to vector<16x144xf32>
    %42 = arith.maximumf %40, %41 : vector<16x144xf32>
    %c0_37 = arith.constant 0 : index
    %c48 = arith.constant 48 : index
    %c0_38 = arith.constant 0 : index
    %43 = vector.load %arg6[%c0_37, %c48, %c0_38] : memref<1x96x144xf32, #tpu.memory_space<vmem>>, vector<1x16x144xf32>
    %44 = vector.shape_cast %43 : vector<1x16x144xf32> to vector<16x144xf32>
    %45 = vector.shape_cast %42 : vector<16x144xf32> to vector<1x16x144xf32>
    tpu.vector_store %arg6[%c0_37, %c48, %c0_38], %45 {strides = array<i32>} : memref<1x96x144xf32, #tpu.memory_space<vmem>>, vector<1x16x144xf32>,
    %c2 = arith.constant 2 : index
    %c0_39 = arith.constant 0 : index
    %c0_40 = arith.constant 0 : index
    %46 = vector.load %arg2[%c2, %c0_39, %c0_40] : memref<4x144x36xbf16, #tpu.memory_space<vmem>>, vector<1x144x36xbf16>
    %47 = vector.shape_cast %46 : vector<1x144x36xbf16> to vector<144x36xbf16>
    %cst_41 = arith.constant dense<0.000000e+00> : vector<32x36xf32>
    %48 = tpu.matmul %5, %47, %cst_41 {dimension_numbers = #tpu.dot_dimension_numbers<[1], [0], [0], [1], [0, 0, 1, 1], [], []>} : vector<32x144xbf16>, vector<144x36xbf16>, vector<32x36xf32> -> vector<32x36xf32>
    %c2_42 = arith.constant 2 : index
    %c0_43 = arith.constant 0 : index
    %c0_44 = arith.constant 0 : index
    %49 = vector.load %arg3[%c2_42, %c0_43, %c0_44] : memref<4x16x32xbf16, #tpu.memory_space<vmem>>, vector<1x16x32xbf16>
    %50 = vector.shape_cast %49 : vector<1x16x32xbf16> to vector<16x32xbf16>
    %51 = arith.truncf %48 : vector<32x36xf32> to vector<32x36xbf16>
    %cst_45 = arith.constant dense<0.000000e+00> : vector<16x36xf32>
    %52 = tpu.matmul %50, %51, %cst_45 {dimension_numbers = #tpu.dot_dimension_numbers<[1], [0], [0], [1], [0, 0, 1, 1], [], []>} : vector<16x32xbf16>, vector<32x36xbf16>, vector<16x36xf32> -> vector<16x36xf32>
    %53 = arith.truncf %52 : vector<16x36xf32> to vector<16x36xbf16>
    %c2_46 = arith.constant 2 : index
    %c0_47 = arith.constant 0 : index
    %c0_48 = arith.constant 0 : index
    %54 = vector.load %arg4[%c2_46, %c0_47, %c0_48] : memref<4x36x144xbf16, #tpu.memory_space<vmem>>, vector<1x36x144xbf16>
    %55 = vector.shape_cast %54 : vector<1x36x144xbf16> to vector<36x144xbf16>
    %cst_49 = arith.constant dense<0.000000e+00> : vector<16x144xf32>
    %56 = tpu.matmul %53, %55, %cst_49 {dimension_numbers = #tpu.dot_dimension_numbers<[1], [0], [0], [1], [0, 0, 1, 1], [], []>} : vector<16x36xbf16>, vector<36x144xbf16>, vector<16x144xf32> -> vector<16x144xf32>
    %c2_50 = arith.constant 2 : index
    %c0_51 = arith.constant 0 : index
    %c0_52 = arith.constant 0 : index
    %57 = vector.load %arg5[%c2_50, %c0_51, %c0_52] : memref<4x16x1xf32, #tpu.memory_space<vmem>>, vector<1x16x1xf32>
    %58 = vector.shape_cast %57 : vector<1x16x1xf32> to vector<16x1xf32>
    %59 = vector.broadcast %58 : vector<16x1xf32> to vector<16x144xf32>
    %60 = arith.addf %56, %59 : vector<16x144xf32>
    %cst_53 = arith.constant 0.000000e+00 : f32
    %61 = vector.broadcast %cst_53 : f32 to vector<16x144xf32>
    %62 = arith.maximumf %60, %61 : vector<16x144xf32>
    %c0_54 = arith.constant 0 : index
    %c64 = arith.constant 64 : index
    %c0_55 = arith.constant 0 : index
    %63 = vector.load %arg6[%c0_54, %c64, %c0_55] : memref<1x96x144xf32, #tpu.memory_space<vmem>>, vector<1x16x144xf32>
    %64 = vector.shape_cast %63 : vector<1x16x144xf32> to vector<16x144xf32>
    %65 = vector.shape_cast %62 : vector<16x144xf32> to vector<1x16x144xf32>
    tpu.vector_store %arg6[%c0_54, %c64, %c0_55], %65 {strides = array<i32>} : memref<1x96x144xf32, #tpu.memory_space<vmem>>, vector<1x16x144xf32>,
    %c3 = arith.constant 3 : index
    %c0_56 = arith.constant 0 : index
    %c0_57 = arith.constant 0 : index
    %66 = vector.load %arg2[%c3, %c0_56, %c0_57] : memref<4x144x36xbf16, #tpu.memory_space<vmem>>, vector<1x144x36xbf16>
    %67 = vector.shape_cast %66 : vector<1x144x36xbf16> to vector<144x36xbf16>
    %cst_58 = arith.constant dense<0.000000e+00> : vector<32x36xf32>
    %68 = tpu.matmul %5, %67, %cst_58 {dimension_numbers = #tpu.dot_dimension_numbers<[1], [0], [0], [1], [0, 0, 1, 1], [], []>} : vector<32x144xbf16>, vector<144x36xbf16>, vector<32x36xf32> -> vector<32x36xf32>
    %c3_59 = arith.constant 3 : index
    %c0_60 = arith.constant 0 : index
    %c0_61 = arith.constant 0 : index
    %69 = vector.load %arg3[%c3_59, %c0_60, %c0_61] : memref<4x16x32xbf16, #tpu.memory_space<vmem>>, vector<1x16x32xbf16>
    %70 = vector.shape_cast %69 : vector<1x16x32xbf16> to vector<16x32xbf16>
    %71 = arith.truncf %68 : vector<32x36xf32> to vector<32x36xbf16>
    %cst_62 = arith.constant dense<0.000000e+00> : vector<16x36xf32>
    %72 = tpu.matmul %70, %71, %cst_62 {dimension_numbers = #tpu.dot_dimension_numbers<[1], [0], [0], [1], [0, 0, 1, 1], [], []>} : vector<16x32xbf16>, vector<32x36xbf16>, vector<16x36xf32> -> vector<16x36xf32>
    %73 = arith.truncf %72 : vector<16x36xf32> to vector<16x36xbf16>
    %c3_63 = arith.constant 3 : index
    %c0_64 = arith.constant 0 : index
    %c0_65 = arith.constant 0 : index
    %74 = vector.load %arg4[%c3_63, %c0_64, %c0_65] : memref<4x36x144xbf16, #tpu.memory_space<vmem>>, vector<1x36x144xbf16>
    %75 = vector.shape_cast %74 : vector<1x36x144xbf16> to vector<36x144xbf16>
    %cst_66 = arith.constant dense<0.000000e+00> : vector<16x144xf32>
    %76 = tpu.matmul %73, %75, %cst_66 {dimension_numbers = #tpu.dot_dimension_numbers<[1], [0], [0], [1], [0, 0, 1, 1], [], []>} : vector<16x36xbf16>, vector<36x144xbf16>, vector<16x144xf32> -> vector<16x144xf32>
    %c3_67 = arith.constant 3 : index
    %c0_68 = arith.constant 0 : index
    %c0_69 = arith.constant 0 : index
    %77 = vector.load %arg5[%c3_67, %c0_68, %c0_69] : memref<4x16x1xf32, #tpu.memory_space<vmem>>, vector<1x16x1xf32>
    %78 = vector.shape_cast %77 : vector<1x16x1xf32> to vector<16x1xf32>
    %79 = vector.broadcast %78 : vector<16x1xf32> to vector<16x144xf32>
    %80 = arith.addf %76, %79 : vector<16x144xf32>
    %cst_70 = arith.constant 0.000000e+00 : f32
    %81 = vector.broadcast %cst_70 : f32 to vector<16x144xf32>
    %82 = arith.maximumf %80, %81 : vector<16x144xf32>
    %c0_71 = arith.constant 0 : index
    %c80 = arith.constant 80 : index
    %c0_72 = arith.constant 0 : index
    %83 = vector.load %arg6[%c0_71, %c80, %c0_72] : memref<1x96x144xf32, #tpu.memory_space<vmem>>, vector<1x16x144xf32>
    %84 = vector.shape_cast %83 : vector<1x16x144xf32> to vector<16x144xf32>
    %85 = vector.shape_cast %82 : vector<16x144xf32> to vector<1x16x144xf32>
    tpu.vector_store %arg6[%c0_71, %c80, %c0_72], %85 {strides = array<i32>} : memref<1x96x144xf32, #tpu.memory_space<vmem>>, vector<1x16x144xf32>,
    return
  }
  func.func @transform_0(%arg0: i32) -> (i32, i32, i32) {
    %c0_i32 = arith.constant 0 : i32
    %c0_i32_0 = arith.constant 0 : i32
    %c0_i32_1 = arith.constant 0 : i32
    return %arg0, %c0_i32, %c0_i32_0 : i32, i32, i32
  }
  func.func @transform_1(%arg0: i32) -> (i32, i32, i32) {
    %c0_i32 = arith.constant 0 : i32
    %c0_i32_0 = arith.constant 0 : i32
    %c0_i32_1 = arith.constant 0 : i32
    %c0_i32_2 = arith.constant 0 : i32
    return %c0_i32, %c0_i32_0, %c0_i32_1 : i32, i32, i32
  }
  func.func @transform_2(%arg0: i32) -> (i32, i32, i32) {
    %c0_i32 = arith.constant 0 : i32
    %c0_i32_0 = arith.constant 0 : i32
    %c0_i32_1 = arith.constant 0 : i32
    %c0_i32_2 = arith.constant 0 : i32
    return %c0_i32, %c0_i32_0, %c0_i32_1 : i32, i32, i32
  }
  func.func @transform_3(%arg0: i32) -> (i32, i32, i32) {
    %c0_i32 = arith.constant 0 : i32
    %c0_i32_0 = arith.constant 0 : i32
    %c0_i32_1 = arith.constant 0 : i32
    %c0_i32_2 = arith.constant 0 : i32
    return %c0_i32, %c0_i32_0, %c0_i32_1 : i32, i32, i32
  }
  func.func @transform_4(%arg0: i32) -> (i32, i32, i32) {
    %c0_i32 = arith.constant 0 : i32
    %c0_i32_0 = arith.constant 0 : i32
    %c0_i32_1 = arith.constant 0 : i32
    %c0_i32_2 = arith.constant 0 : i32
    return %c0_i32, %c0_i32_0, %c0_i32_1 : i32, i32, i32
  }
  func.func @transform_5(%arg0: i32) -> (i32, i32, i32) {
    %c0_i32 = arith.constant 0 : i32
    %c0_i32_0 = arith.constant 0 : i32
    %c0_i32_1 = arith.constant 0 : i32
    return %arg0, %c0_i32, %c0_i32_0 : i32, i32, i32
  }
}

</mosaic_0001>

<llo_original>
// kernel: tpu_custom_call.1
$region0: #{tpu_custom_call.1}
  #allocation0 [shape = 'u32[]', space=smem, size = 0x4, offset = 0x4, fixed_abs, tag = 'smem constant byte address 0x4 - core index']
  #allocation1 [shape = 'u32[144,128]{1,0:T(1,128)}', space=vmem, size = 0x12000, scoped, tag = 'internal scratch']
  %s0 = inlined_call_operand.vmem [shape: f32[2,32,144], index: 0, kind: input, shape index: {}]
  %s1 = inlined_call_operand.vmem [shape: bf16[4,144,36], index: 1, kind: input, shape index: {}]
  %s2 = inlined_call_operand.vmem [shape: bf16[4,16,32], index: 2, kind: input, shape index: {}]
  %s3 = inlined_call_operand.vmem [shape: bf16[4,36,144], index: 3, kind: input, shape index: {}]
  %s4 = inlined_call_operand.vmem [shape: f32[4,16,1], index: 4, kind: input, shape index: {}]
  %s5 = inlined_call_operand.vmem [shape: f32[2,96,144], index: 5, kind: output, shape index: {}]
  %s6 = sld [smem:[#allocation0]]
  $region53: #{tpu_custom_call.1} parent=0
    _
  %s8 = ssub.s32 1, %s6
  %s9 = scalar_select 0, %s8, %s6
  loop: start=0, step=1, limit=4
  $region2: #{tpu_custom_call.1} parent=0 // loop_pre_header
    _
  $region3: #{tpu_custom_call.1} parent=0 // loop_header
    %s11 = sphi 0, %s15
    %p12 = scmp.ge.s32.totalorder %s11, 4
    %s21 = sphi 0, %s23
    %s24 = sphi 0, %s21
    %s25 = sphi 0, %s24
    %s41 = sphi 0, %s25
    %s45 = sphi 0, %s45
    %s47 = sphi 0, %s45
    %s48 = sphi 0, %s47
    %s62 = sphi 0, %s48
    %s66 = sphi 0, %s66
    %s68 = sphi 0, %s66
    %s69 = sphi 0, %s68
    %s83 = sphi 0, %s69
    %s87 = sphi 0, %s87
    %s89 = sphi 0, %s87
    %s90 = sphi 0, %s89
    %s104 = sphi 0, %s90
    %s108 = sphi 0, %s108
    %s110 = sphi 0, %s108
    %s111 = sphi 0, %s110
    %s125 = sphi 0, %s111
    %s131 = sphi 0, %s133
    %s134 = sphi 0, %s131
    %s135 = sphi 0, %s134
    %s151 = sphi 0, %s135
  $region4: #{tpu_custom_call.1} parent=0 // loop_header_branch
    %14 = sbr.rel (%p12) target = $region8
  $region5: #{tpu_custom_call.1} parent=0 // loop_body
    %s16 = ssub.s32 %s11, 1
    %s17 = ssub.s32 %s11, 2
    %s18 = sadd.s32 %s11, 1
    %s19 = ssub.s32 %s11, %s18
    %p20 = scmp.eq.s32.totalorder %s19, 0
    %s22 = sadd.s32 %s21, 1
    %s23 = scalar_select %p20, %s21, %s22
    %p26 = pneg %p20
    %p27 = scmp.eq.s32.totalorder %s11, 1
    %p28 = por %p26, %p27
    %p29 = scmp.ne.s32.totalorder %s21, %s24
    %p30 = scmp.eq.s32.totalorder %s11, 0
    %p31 = por %p29, %p30
    %p32 = scmp.ne.s32.totalorder %s21, %s24
    %p33 = scmp.eq.s32.totalorder %s16, 1
    %p34 = por %p32, %p33
    %p35 = scmp.ne.s32.totalorder %s24, %s25
    %p36 = scmp.eq.s32.totalorder %s16, 0
    %p37 = por %p35, %p36
    %p38 = scmp.ne.s32.totalorder %s24, %s25
    %p39 = scmp.eq.s32.totalorder %s17, 1
    %p40 = por %p38, %p39
    %p42 = scmp.ne.s32.totalorder %s25, %s41
    %p43 = scmp.eq.s32.totalorder %s17, 0
    %p44 = por %p42, %p43
    %s46 = sadd.s32 %s45, 1
    %p49 = scmp.eq.s32.totalorder %s11, 1
    %p50 = scmp.ne.s32.totalorder %s45, %s47
    %p51 = scmp.eq.s32.totalorder %s11, 0
    %p52 = por %p50, %p51
    %p53 = scmp.ne.s32.totalorder %s45, %s47
    %p54 = scmp.eq.s32.totalorder %s16, 1
    %p55 = por %p53, %p54
    %p56 = scmp.ne.s32.totalorder %s47, %s48
    %p57 = scmp.eq.s32.totalorder %s16, 0
    %p58 = por %p56, %p57
    %p59 = scmp.ne.s32.totalorder %s47, %s48
    %p60 = scmp.eq.s32.totalorder %s17, 1
    %p61 = por %p59, %p60
    %p63 = scmp.ne.s32.totalorder %s48, %s62
    %p64 = scmp.eq.s32.totalorder %s17, 0
    %p65 = por %p63, %p64
    %s67 = sadd.s32 %s66, 1
    %p70 = scmp.eq.s32.totalorder %s11, 1
    %p71 = scmp.ne.s32.totalorder %s66, %s68
    %p72 = scmp.eq.s32.totalorder %s11, 0
    %p73 = por %p71, %p72
    %p74 = scmp.ne.s32.totalorder %s66, %s68
    %p75 = scmp.eq.s32.totalorder %s16, 1
    %p76 = por %p74, %p75
    %p77 = scmp.ne.s32.totalorder %s68, %s69
    %p78 = scmp.eq.s32.totalorder %s16, 0
    %p79 = por %p77, %p78
    %p80 = scmp.ne.s32.totalorder %s68, %s69
    %p81 = scmp.eq.s32.totalorder %s17, 1
    %p82 = por %p80, %p81
    %p84 = scmp.ne.s32.totalorder %s69, %s83
    %p85 = scmp.eq.s32.totalorder %s17, 0
    %p86 = por %p84, %p85
    %s88 = sadd.s32 %s87, 1
    %p91 = scmp.eq.s32.totalorder %s11, 1
    %p92 = scmp.ne.s32.totalorder %s87, %s89
    %p93 = scmp.eq.s32.totalorder %s11, 0
    %p94 = por %p92, %p93
    %p95 = scmp.ne.s32.totalorder %s87, %s89
    %p96 = scmp.eq.s32.totalorder %s16, 1
    %p97 = por %p95, %p96
    %p98 = scmp.ne.s32.totalorder %s89, %s90
    %p99 = scmp.eq.s32.totalorder %s16, 0
    %p100 = por %p98, %p99
    %p101 = scmp.ne.s32.totalorder %s89, %s90
    %p102 = scmp.eq.s32.totalorder %s17, 1
    %p103 = por %p101, %p102
    %p105 = scmp.ne.s32.totalorder %s90, %s104
    %p106 = scmp.eq.s32.totalorder %s17, 0
    %p107 = por %p105, %p106
    %s109 = sadd.s32 %s108, 1
    %p112 = scmp.eq.s32.totalorder %s11, 1
    %p113 = scmp.ne.s32.totalorder %s108, %s110
    %p114 = scmp.eq.s32.totalorder %s11, 0
    %p115 = por %p113, %p114
    %p116 = scmp.ne.s32.totalorder %s108, %s110
    %p117 = scmp.eq.s32.totalorder %s16, 1
    %p118 = por %p116, %p117
    %p119 = scmp.ne.s32.totalorder %s110, %s111
    %p120 = scmp.eq.s32.totalorder %s16, 0
    %p121 = por %p119, %p120
    %p122 = scmp.ne.s32.totalorder %s110, %s111
    %p123 = scmp.eq.s32.totalorder %s17, 1
    %p124 = por %p122, %p123
    %p126 = scmp.ne.s32.totalorder %s111, %s125
    %p127 = scmp.eq.s32.totalorder %s17, 0
    %p128 = por %p126, %p127
    %s129 = ssub.s32 %s11, %s18
    %p130 = scmp.eq.s32.totalorder %s129, 0
    %s132 = sadd.s32 %s131, 1
    %s133 = scalar_select %p130, %s131, %s132
    %p136 = pneg %p130
    %p137 = scmp.eq.s32.totalorder %s11, 1
    %p138 = por %p136, %p137
    %p139 = scmp.ne.s32.totalorder %s131, %s134
    %p140 = scmp.eq.s32.totalorder %s11, 0
    %p141 = por %p139, %p140
    %p142 = scmp.ne.s32.totalorder %s131, %s134
    %p143 = scmp.eq.s32.totalorder %s16, 1
    %p144 = por %p142, %p143
    %p145 = scmp.ne.s32.totalorder %s134, %s135
    %p146 = scmp.eq.s32.totalorder %s16, 0
    %p147 = por %p145, %p146
    %p148 = scmp.ne.s32.totalorder %s134, %s135
    %p149 = scmp.eq.s32.totalorder %s17, 1
    %p150 = por %p148, %p149
    %p152 = scmp.ne.s32.totalorder %s135, %s151
    %p153 = scmp.eq.s32.totalorder %s17, 0
    %p154 = por %p152, %p153
    %p155 = scmp.le.s32.totalorder 1, %s11
    %p156 = scmp.lt.s32.totalorder %s11, 3
    %p157 = pnand %p155, %p156
    %p158 = pneg %p157
    // Predicated region
    $region9: #{tpu_custom_call.1} parent=5 // pred_check
      _
    $region10: #{tpu_custom_call.1} parent=5 // pred_check_branch
      %160 = sbr.rel (%p157) target = $region12
    $region11: #{tpu_custom_call.1} parent=5 // pred_region
      %s161 = ssub.s32 %s11, 1
      // Predicated region
      $region13: #{tpu_custom_call.1} parent=11 // pred_check
        %p162 = pneg %p58
      $region14: #{tpu_custom_call.1} parent=11 // pred_check_branch
        %164 = sbr.rel (%p162) target = $region16
      $region15: #{tpu_custom_call.1} parent=11 // pred_region
        _
      $region16: #{tpu_custom_call.1} parent=11 // pred_fallthru
        _
      // Predicated region
      $region17: #{tpu_custom_call.1} parent=11 // pred_check
        %p165 = pneg %p79
      $region18: #{tpu_custom_call.1} parent=11 // pred_check_branch
        %167 = sbr.rel (%p165) target = $region20
      $region19: #{tpu_custom_call.1} parent=11 // pred_region
        _
      $region20: #{tpu_custom_call.1} parent=11 // pred_fallthru
        _
      // Predicated region
      $region21: #{tpu_custom_call.1} parent=11 // pred_check
        %p168 = pneg %p100
      $region22: #{tpu_custom_call.1} parent=11 // pred_check_branch
        %170 = sbr.rel (%p168) target = $region24
      $region23: #{tpu_custom_call.1} parent=11 // pred_region
        _
      $region24: #{tpu_custom_call.1} parent=11 // pred_fallthru
        _
      // Predicated region
      $region25: #{tpu_custom_call.1} parent=11 // pred_check
        %p171 = pneg %p121
      $region26: #{tpu_custom_call.1} parent=11 // pred_check_branch
        %173 = sbr.rel (%p171) target = $region28
      $region27: #{tpu_custom_call.1} parent=11 // pred_region
        _
      $region28: #{tpu_custom_call.1} parent=11 // pred_fallthru
        _
    $region12: #{tpu_custom_call.1} parent=5 // pred_fallthru
      _
    %p174 = scmp.lt.s32.totalorder %s11, 2
    // Predicated region
    $region29: #{tpu_custom_call.1} parent=5 // pred_check
      %p175 = pneg %p174
    $region30: #{tpu_custom_call.1} parent=5 // pred_check_branch
      %177 = sbr.rel (%p175) target = $region32
    $region31: #{tpu_custom_call.1} parent=5 // pred_region
      // Predicated region
      $region33: #{tpu_custom_call.1} parent=31 // pred_check
        %p178 = pneg %p31
      $region34: #{tpu_custom_call.1} parent=31 // pred_check_branch
        %180 = sbr.rel (%p178) target = $region36
      $region35: #{tpu_custom_call.1} parent=31 // pred_region
        %p181 = scmp.lt.s32.totalorder %s11, 1
        %s182 = scalar_select %p181, %s11, 1
        %s183 = smul.addr %s182, 8
        %s184 = smul.addr %s183, 8
        %s185 = scalar_lea.vmem %s0, %s184
      $region36: #{tpu_custom_call.1} parent=31 // pred_fallthru
        _
    $region32: #{tpu_custom_call.1} parent=5 // pred_fallthru
      _
    %p186 = scmp.le.s32.totalorder 1, %s11
    %p187 = scmp.lt.s32.totalorder %s11, 3
    %p188 = pnand %p186, %p187
    %p189 = pneg %p188
    // Predicated region
    $region37: #{tpu_custom_call.1} parent=5 // pred_check
      _
    $region38: #{tpu_custom_call.1} parent=5 // pred_check_branch
      %191 = sbr.rel (%p188) target = $region40
    $region39: #{tpu_custom_call.1} parent=5 // pred_region
      %s192 = ssub.s32 %s11, 1
      %p193 = scmp.lt.s32.totalorder %s16, 1
      %s194 = scalar_select %p193, %s16, 1
      %s195 = smul.addr %s194, 8
      %s196 = smul.addr %s195, 8
      %s197 = scalar_lea.vmem %s0, %s196
      %p198 = pneg %p37
      %p199 = pneg %p34
      %p200 = pneg %p58
      %p201 = pneg %p55
      %p202 = pneg %p79
      %p203 = pneg %p76
      %p204 = pneg %p100
      %p205 = pneg %p97
      %p206 = pneg %p121
      %p207 = pneg %p118
      %p208 = pneg %p147
      %p209 = pneg %p144
      %p210 = scmp.lt.s32.totalorder %s16, 1
      %s211 = scalar_select %p210, %s16, 1
      %s212 = smul.addr %s211, 24
      %s213 = smul.addr %s212, 8
      %s214 = scalar_lea.vmem %s5, %s213
      %p215 = scmp.lt.s32.totalorder %s16, 1
      %s216 = scalar_select %p215, %s16, 1
      %s217 = smul.addr %s216, 8
      %s218 = smul.addr %s217, 8
      %s219 = scalar_lea.vmem %s0, %s218
      %p220 = scmp.lt.s32.totalorder %s16, 1
      %s221 = scalar_select %p220, %s16, 1
      %s222 = smul.addr %s221, 24
      %s223 = smul.addr %s222, 8
      %s224 = scalar_lea.vmem %s5, %s223
      %v226 = vld [vmem:[%s219] sm:$0xff]
      %v227 = vld [vmem:[%s219 + $0x8] sm:$0xff]
      %v228 = vld [vmem:[%s219 + $0x10] sm:$0xff]
      %v229 = vld [vmem:[%s219 + $0x18] sm:$0xff]
      %v230 = vld [vmem:[%s219 + $0x20] sm:$0xff]
      %v231 = vld [vmem:[%s219 + $0x28] sm:$0xff]
      %v232 = vld [vmem:[%s219 + $0x30] sm:$0xff]
      %v233 = vld [vmem:[%s219 + $0x38] sm:$0xff]
      %234 = vst [vmem:[%s224] sm:$0xff] %v226
      %vm235 = vcmask 130048
      %236 = vst.msk [vmem:[%s224 + $0x8] sm:$0xff] %vm235, %v227
      %237 = vst [vmem:[%s224 + $0x10] sm:$0xff] %v228
      %238 = vst.msk [vmem:[%s224 + $0x18] sm:$0xff] %vm235, %v229
      %239 = vst [vmem:[%s224 + $0x20] sm:$0xff] %v230
      %240 = vst.msk [vmem:[%s224 + $0x28] sm:$0xff] %vm235, %v231
      %241 = vst [vmem:[%s224 + $0x30] sm:$0xff] %v232
      %242 = vst.msk [vmem:[%s224 + $0x38] sm:$0xff] %vm235, %v233
      %v243 = vpack.c.bf16 %v228, %v226
      %v244 = vpack.c.bf16 %v229, %v227
      %v245 = vpack.c.bf16 %v232, %v230
      %v246 = vpack.c.bf16 %v233, %v231
      %v247 = vld [vmem:[%s1] sm:$0xf]
      %v248 = vld [vmem:[%s1 + $0x4] sm:$0xf]
      %v249 = vld [vmem:[%s1 + $0x8] sm:$0xf]
      %v250 = vld [vmem:[%s1 + $0xc] sm:$0xf]
      %v251 = vld [vmem:[%s1 + $0x10] sm:$0xf]
      %v252 = vld [vmem:[%s1 + $0x14] sm:$0xf]
      %v253 = vld [vmem:[%s1 + $0x18] sm:$0xf]
      %v254 = vld [vmem:[%s1 + $0x1c] sm:$0xf]
      %v255 = vld [vmem:[%s1 + $0x20] sm:$0xf]
      %v256 = vld [vmem:[%s1 + $0x24] sm:$0xf]
      %v257 = vld [vmem:[%s1 + $0x28] sm:$0xf]
      %v258 = vld [vmem:[%s1 + $0x2c] sm:$0xf]
      %v259 = vld [vmem:[%s1 + $0x30] sm:$0xf]
      %v260 = vld [vmem:[%s1 + $0x34] sm:$0xf]
      %v261 = vld [vmem:[%s1 + $0x38] sm:$0xf]
      %v262 = vld [vmem:[%s1 + $0x3c] sm:$0xf]
      %v263 = vld [vmem:[%s1 + $0x40] sm:$0xf]
      %v264 = vld [vmem:[%s1 + $0x44] sm:$0xf]
      %v283 = vunpack.c.l.b16 %v247
      %v284 = vunpack.c.l.b16 %v248
      %v285 = vunpack.c.l.b16 %v249
      %v286 = vunpack.c.l.b16 %v250
      %v287 = vunpack.c.l.b16 %v251
      %v288 = vunpack.c.l.b16 %v252
      %v289 = vunpack.c.l.b16 %v253
      %v290 = vunpack.c.l.b16 %v254
      %v291 = vunpack.c.l.b16 %v255
      %v292 = vunpack.c.l.b16 %v256
      %v293 = vunpack.c.l.b16 %v257
      %v294 = vunpack.c.l.b16 %v258
      %v295 = vunpack.c.l.b16 %v259
      %v296 = vunpack.c.l.b16 %v260
      %v297 = vunpack.c.l.b16 %v261
      %v298 = vunpack.c.l.b16 %v262
      %v299 = vunpack.c.l.b16 %v263
      %v300 = vunpack.c.l.b16 %v264
      %v301 = vpack.c.b16 %v284, %v283
      %v302 = vpack.c.b16 %v286, %v285
      %v303 = vpack.c.b16 %v288, %v287
      %v304 = vpack.c.b16 %v290, %v289
      %v305 = vpack.c.b16 %v292, %v291
      %v306 = vpack.c.b16 %v294, %v293
      %v307 = vpack.c.b16 %v296, %v295
      %v308 = vpack.c.b16 %v298, %v297
      %v309 = vpack.c.b16 %v300, %v299
      %v320 = vsel %vm235, %v244, 0
      %v323 = vsel %vm235, %v246, 0
      %325 = vmatprep.subr.bf16.mxu0 0
      %326 = vmatpush1.bf16.msra.mxu0 %v308
      %327 = vmatprep.subr.bf16.mxu0 0
      %328 = vmatpush1.bf16.msra.mxu0 %v307
      %329 = vmatprep.subr.bf16.mxu0 0
      %330 = vmatpush1.bf16.msra.mxu0 %v306
      %331 = vmatprep.subr.bf16.mxu0 0
      %332 = vmatpush1.bf16.msra.mxu0 %v305
      %333 = vmatprep.subr.bf16.mxu0 0
      %334 = vmatpush1.bf16.msra.mxu0 %v304
      %335 = vmatprep.subr.bf16.mxu0 0
      %336 = vmatpush1.bf16.msra.mxu0 %v303
      %337 = vmatprep.subr.bf16.mxu0 0
      %338 = vmatpush1.bf16.msra.mxu0 %v302
      %339 = vmatprep.subr.bf16.mxu0 0
      %340 = vmatpush1.bf16.msra.mxu0 %v301
      %341 = vmatprep.subr.bf16.mxu0 0
      %342 = vmatpush2.bf16.msra.mxu0 0
      %343 = vmatprep.subr.bf16.mxu0 0
      %344 = vmatpush2.bf16.msra.mxu0 0
      %345 = vmatprep.subr.bf16.mxu0 0
      %346 = vmatpush2.bf16.msra.mxu0 0
      %347 = vmatprep.subr.bf16.mxu0 0
      %348 = vmatpush2.bf16.msra.mxu0 0
      %349 = vmatprep.subr.bf16.mxu0 0
      %350 = vmatpush2.bf16.msra.mxu0 0
      %351 = vmatprep.subr.bf16.mxu0 0
      %352 = vmatpush2.bf16.msra.mxu0 0
      %353 = vmatprep.subr.bf16.mxu0 0
      %354 = vmatpush2.bf16.msra.mxu0 0
      %355 = vmatprep.subr.bf16.mxu0 0
      %356 = vmatpush2.bf16.msra.mxu0 %v309
      %357 = vmatprep.mubr.bf16.mxu0 %v320
      %358 = vmatmul.mubr.bf16.gmra.mxu0 %v243
      %v359 = vpop.f32.mrf.mxu0
      %v360 = vadd.f32 0.0, %v359
      %v361 = vpop.f32.mrf.mxu0
      %v362 = vpop.f32.mrf.mxu0
      %v363 = vadd.f32 0.0, %v362
      %v364 = vpop.f32.mrf.mxu0
      %365 = vmatprep.mubr.bf16.mxu0 %v323
      %366 = vmatmul.mubr.bf16.gmra.mxu0 %v245
      %v367 = vpop.f32.mrf.mxu0
      %v368 = vadd.f32 0.0, %v367
      %v369 = vpop.f32.mrf.mxu0
      %v370 = vpop.f32.mrf.mxu0
      %v371 = vadd.f32 0.0, %v370
      %v372 = vpop.f32.mrf.mxu0
      %373 = vdwg.mxu0
      %v374 = vld [vmem:[%s2] sm:$0xf]
      %v375 = vld [vmem:[%s2 + $0x4] sm:$0xf]
      %v376 = vpack.c.bf16 %v363, %v360
      %v377 = vpack.c.bf16 %v371, %v368
      %v380 = vunpack.c.l.b16 %v374
      %v381 = vunpack.c.l.b16 %v375
      %v382 = vpack.c.b16 %v381, %v380
      %vm383 = vcmask 261120
      %v385 = vsel %vm383, %v382, 0
      %387 = vmatprep.subr.bf16.mxu0 0
      %388 = vmatpush1.bf16.msra.mxu0 0
      %389 = vmatprep.subr.bf16.mxu0 0
      %390 = vmatpush1.bf16.msra.mxu0 0
      %391 = vmatprep.subr.bf16.mxu0 0
      %392 = vmatpush1.bf16.msra.mxu0 0
      %393 = vmatprep.subr.bf16.mxu0 0
      %394 = vmatpush1.bf16.msra.mxu0 0
      %395 = vmatprep.subr.bf16.mxu0 0
      %396 = vmatpush1.bf16.msra.mxu0 0
      %397 = vmatprep.subr.bf16.mxu0 0
      %398 = vmatpush1.bf16.msra.mxu0 0
      %399 = vmatprep.subr.bf16.mxu0 0
      %400 = vmatpush1.bf16.msra.mxu0 %v377
      %401 = vmatprep.subr.bf16.mxu0 0
      %402 = vmatpush1.bf16.msra.mxu0 %v376
      %403 = vmatprep.subr.bf16.mxu0 0
      %404 = vmatpush2.bf16.msra.mxu0 0
      %405 = vmatprep.subr.bf16.mxu0 0
      %406 = vmatpush2.bf16.msra.mxu0 0
      %407 = vmatprep.subr.bf16.mxu0 0
      %408 = vmatpush2.bf16.msra.mxu0 0
      %409 = vmatprep.subr.bf16.mxu0 0
      %410 = vmatpush2.bf16.msra.mxu0 0
      %411 = vmatprep.subr.bf16.mxu0 0
      %412 = vmatpush2.bf16.msra.mxu0 0
      %413 = vmatprep.subr.bf16.mxu0 0
      %414 = vmatpush2.bf16.msra.mxu0 0
      %415 = vmatprep.subr.bf16.mxu0 0
      %416 = vmatpush2.bf16.msra.mxu0 0
      %417 = vmatprep.subr.bf16.mxu0 0
      %418 = vmatpush2.bf16.msra.mxu0 0
      %419 = vmatprep.mubr.bf16.mxu0 0
      %420 = vmatmul.mubr.bf16.gmra.mxu0 %v385
      %v421 = vpop.f32.mrf.mxu0
      %v422 = vadd.f32 0.0, %v421
      %v423 = vpop.f32.mrf.mxu0
      %v424 = vpop.f32.mrf.mxu0
      %v425 = vadd.f32 0.0, %v424
      %v426 = vpop.f32.mrf.mxu0
      %427 = vdwg.mxu0
      %v428 = vpack.c.bf16 %v425, %v422
      %v429 = vld [vmem:[%s3] sm:$0xff]
      %v430 = vld [vmem:[%s3 + $0x8] sm:$0xff]
      %v431 = vld [vmem:[%s3 + $0x10] sm:$0xff]
      %v432 = vld [vmem:[%s3 + $0x18] sm:$0xff]
      %v433 = vld [vmem:[%s3 + $0x20] sm:$0x33]
      %v434 = vld [vmem:[%s4] sm:$0xff]
      %v435 = vld [vmem:[%s4 + $0x8] sm:$0xff]
      %437 = vset.pattern.permute.xlu0 0
      %438 = vperm.xlu0 %437, %v434
      %v439 = vpop.permute.xlu0 %438
      %442 = vset.pattern.permute.xlu0 0
      %443 = vperm.xlu0 %442, %v435
      %v444 = vpop.permute.xlu0 %443
      %v451 = vunpack.c.l.b16 %v429
      %v452 = vunpack.c.h.b16 %v429
      %v453 = vunpack.c.l.b16 %v430
      %v454 = vunpack.c.h.b16 %v430
      %v455 = vunpack.c.l.b16 %v431
      %v456 = vunpack.c.h.b16 %v431
      %v457 = vunpack.c.l.b16 %v432
      %v458 = vunpack.c.h.b16 %v432
      %v459 = vunpack.c.l.b16 %v433
      %v460 = vunpack.c.h.b16 %v433
      %v461 = vpack.c.b16 %v453, %v451
      %v462 = vpack.c.b16 %v454, %v452
      %v463 = vpack.c.b16 %v457, %v455
      %v464 = vpack.c.b16 %v458, %v456
      %v465 = vpack.c.b16 %v459, %v459
      %v466 = vpack.c.b16 %v460, %v460
      %vm471 = vcmask 293888
      %v473 = vsel %vm471, %v428, 0
      %vm475 = vcmask 1041408
      %v477 = vsel %vm475, %v465, 0
      %v480 = vsel %vm475, %v466, 0
      %482 = vmatprep.subr.bf16.mxu0 0
      %483 = vmatpush1.bf16.msra.mxu0 0
      %484 = vmatprep.subr.bf16.mxu0 0
      %485 = vmatpush1.bf16.msra.mxu0 0
      %486 = vmatprep.subr.bf16.mxu0 0
      %487 = vmatpush1.bf16.msra.mxu0 0
      %488 = vmatprep.subr.bf16.mxu0 0
      %489 = vmatpush1.bf16.msra.mxu0 0
      %490 = vmatprep.subr.bf16.mxu0 0
      %491 = vmatpush1.bf16.msra.mxu0 0
      %492 = vmatprep.subr.bf16.mxu0 %v480
      %493 = vmatpush1.bf16.msra.mxu0 %v477
      %494 = vmatprep.subr.bf16.mxu0 %v464
      %495 = vmatpush1.bf16.msra.mxu0 %v463
      %496 = vmatprep.subr.bf16.mxu0 %v462
      %497 = vmatpush1.bf16.msra.mxu0 %v461
      %498 = vmatprep.subr.bf16.mxu0 0
      %499 = vmatpush2.bf16.msra.mxu0 0
      %500 = vmatprep.subr.bf16.mxu0 0
      %501 = vmatpush2.bf16.msra.mxu0 0
      %502 = vmatprep.subr.bf16.mxu0 0
      %503 = vmatpush2.bf16.msra.mxu0 0
      %504 = vmatprep.subr.bf16.mxu0 0
      %505 = vmatpush2.bf16.msra.mxu0 0
      %506 = vmatprep.subr.bf16.mxu0 0
      %507 = vmatpush2.bf16.msra.mxu0 0
      %508 = vmatprep.subr.bf16.mxu0 0
      %509 = vmatpush2.bf16.msra.mxu0 0
      %510 = vmatprep.subr.bf16.mxu0 0
      %511 = vmatpush2.bf16.msra.mxu0 0
      %512 = vmatprep.subr.bf16.mxu0 0
      %513 = vmatpush2.bf16.msra.mxu0 0
      %514 = vmatprep.mubr.bf16.mxu0 0
      %515 = vmatmul.mubr.bf16.gmra.mxu0 %v473
      %v516 = vpop.f32.mrf.mxu0
      %v517 = vadd.f32 %v439, %v516
      %v518 = vpop.f32.mrf.mxu0
      %v519 = vadd.f32 %v439, %v518
      %v520 = vpop.f32.mrf.mxu0
      %v521 = vadd.f32 %v444, %v520
      %v522 = vpop.f32.mrf.mxu0
      %v523 = vadd.f32 %v444, %v522
      %524 = vdwg.mxu0
      %v525 = vmax.f32 %v517, 0.0
      %v526 = vmax.f32 %v519, 0.0
      %v527 = vmax.f32 %v521, 0.0
      %v528 = vmax.f32 %v523, 0.0
      %529 = vst [vmem:[%s224 + $0x40] sm:$0xff] %v525
      %530 = vst.msk [vmem:[%s224 + $0x48] sm:$0xff] %vm235, %v526
      %531 = vst [vmem:[%s224 + $0x50] sm:$0xff] %v527
      %532 = vst.msk [vmem:[%s224 + $0x58] sm:$0xff] %vm235, %v528
      %s533 = scalar_lea.vmem %s1, 72
      %v534 = vld [vmem:[%s533] sm:$0xf]
      %v535 = vld [vmem:[%s533 + $0x4] sm:$0xf]
      %v536 = vld [vmem:[%s533 + $0x8] sm:$0xf]
      %v537 = vld [vmem:[%s533 + $0xc] sm:$0xf]
      %v538 = vld [vmem:[%s533 + $0x10] sm:$0xf]
      %v539 = vld [vmem:[%s533 + $0x14] sm:$0xf]
      %v540 = vld [vmem:[%s533 + $0x18] sm:$0xf]
      %v541 = vld [vmem:[%s533 + $0x1c] sm:$0xf]
      %v542 = vld [vmem:[%s533 + $0x20] sm:$0xf]
      %v543 = vld [vmem:[%s533 + $0x24] sm:$0xf]
      %v544 = vld [vmem:[%s533 + $0x28] sm:$0xf]
      %v545 = vld [vmem:[%s533 + $0x2c] sm:$0xf]
      %v546 = vld [vmem:[%s533 + $0x30] sm:$0xf]
      %v547 = vld [vmem:[%s533 + $0x34] sm:$0xf]
      %v548 = vld [vmem:[%s533 + $0x38] sm:$0xf]
      %v549 = vld [vmem:[%s533 + $0x3c] sm:$0xf]
      %v550 = vld [vmem:[%s533 + $0x40] sm:$0xf]
      %v551 = vld [vmem:[%s533 + $0x44] sm:$0xf]
      %v570 = vunpack.c.l.b16 %v534
      %v571 = vunpack.c.l.b16 %v535
      %v572 = vunpack.c.l.b16 %v536
      %v573 = vunpack.c.l.b16 %v537
      %v574 = vunpack.c.l.b16 %v538
      %v575 = vunpack.c.l.b16 %v539
      %v576 = vunpack.c.l.b16 %v540
      %v577 = vunpack.c.l.b16 %v541
      %v578 = vunpack.c.l.b16 %v542
      %v579 = vunpack.c.l.b16 %v543
      %v580 = vunpack.c.l.b16 %v544
      %v581 = vunpack.c.l.b16 %v545
      %v582 = vunpack.c.l.b16 %v546
      %v583 = vunpack.c.l.b16 %v547
      %v584 = vunpack.c.l.b16 %v548
      %v585 = vunpack.c.l.b16 %v549
      %v586 = vunpack.c.l.b16 %v550
      %v587 = vunpack.c.l.b16 %v551
      %v588 = vpack.c.b16 %v571, %v570
      %v589 = vpack.c.b16 %v573, %v572
      %v590 = vpack.c.b16 %v575, %v574
      %v591 = vpack.c.b16 %v577, %v576
      %v592 = vpack.c.b16 %v579, %v578
      %v593 = vpack.c.b16 %v581, %v580
      %v594 = vpack.c.b16 %v583, %v582
      %v595 = vpack.c.b16 %v585, %v584
      %v596 = vpack.c.b16 %v587, %v586
      %606 = vmatprep.subr.bf16.mxu0 0
      %607 = vmatpush1.bf16.msra.mxu0 %v595
      %608 = vmatprep.subr.bf16.mxu0 0
      %609 = vmatpush1.bf16.msra.mxu0 %v594
      %610 = vmatprep.subr.bf16.mxu0 0
      %611 = vmatpush1.bf16.msra.mxu0 %v593
      %612 = vmatprep.subr.bf16.mxu0 0
      %613 = vmatpush1.bf16.msra.mxu0 %v592
      %614 = vmatprep.subr.bf16.mxu0 0
      %615 = vmatpush1.bf16.msra.mxu0 %v591
      %616 = vmatprep.subr.bf16.mxu0 0
      %617 = vmatpush1.bf16.msra.mxu0 %v590
      %618 = vmatprep.subr.bf16.mxu0 0
      %619 = vmatpush1.bf16.msra.mxu0 %v589
      %620 = vmatprep.subr.bf16.mxu0 0
      %621 = vmatpush1.bf16.msra.mxu0 %v588
      %622 = vmatprep.subr.bf16.mxu0 0
      %623 = vmatpush2.bf16.msra.mxu0 0
      %624 = vmatprep.subr.bf16.mxu0 0
      %625 = vmatpush2.bf16.msra.mxu0 0
      %626 = vmatprep.subr.bf16.mxu0 0
      %627 = vmatpush2.bf16.msra.mxu0 0
      %628 = vmatprep.subr.bf16.mxu0 0
      %629 = vmatpush2.bf16.msra.mxu0 0
      %630 = vmatprep.subr.bf16.mxu0 0
      %631 = vmatpush2.bf16.msra.mxu0 0
      %632 = vmatprep.subr.bf16.mxu0 0
      %633 = vmatpush2.bf16.msra.mxu0 0
      %634 = vmatprep.subr.bf16.mxu0 0
      %635 = vmatpush2.bf16.msra.mxu0 0
      %636 = vmatprep.subr.bf16.mxu0 0
      %637 = vmatpush2.bf16.msra.mxu0 %v596
      %638 = vmatprep.mubr.bf16.mxu0 %v320
      %639 = vmatmul.mubr.bf16.gmra.mxu0 %v243
      %v640 = vpop.f32.mrf.mxu0
      %v641 = vadd.f32 0.0, %v640
      %v642 = vpop.f32.mrf.mxu0
      %v643 = vpop.f32.mrf.mxu0
      %v644 = vadd.f32 0.0, %v643
      %v645 = vpop.f32.mrf.mxu0
      %646 = vmatprep.mubr.bf16.mxu0 %v323
      %647 = vmatmul.mubr.bf16.gmra.mxu0 %v245
      %v648 = vpop.f32.mrf.mxu0
      %v649 = vadd.f32 0.0, %v648
      %v650 = vpop.f32.mrf.mxu0
      %v651 = vpop.f32.mrf.mxu0
      %v652 = vadd.f32 0.0, %v651
      %v653 = vpop.f32.mrf.mxu0
      %654 = vdwg.mxu0
      %s655 = scalar_lea.vmem %s2, 8
      %v656 = vld [vmem:[%s655] sm:$0xf]
      %v657 = vld [vmem:[%s655 + $0x4] sm:$0xf]
      %v658 = vpack.c.bf16 %v644, %v641
      %v659 = vpack.c.bf16 %v652, %v649
      %v662 = vunpack.c.l.b16 %v656
      %v663 = vunpack.c.l.b16 %v657
      %v664 = vpack.c.b16 %v663, %v662
      %v666 = vsel %vm383, %v664, 0
      %668 = vmatprep.subr.bf16.mxu0 0
      %669 = vmatpush1.bf16.msra.mxu0 0
      %670 = vmatprep.subr.bf16.mxu0 0
      %671 = vmatpush1.bf16.msra.mxu0 0
      %672 = vmatprep.subr.bf16.mxu0 0
      %673 = vmatpush1.bf16.msra.mxu0 0
      %674 = vmatprep.subr.bf16.mxu0 0
      %675 = vmatpush1.bf16.msra.mxu0 0
      %676 = vmatprep.subr.bf16.mxu0 0
      %677 = vmatpush1.bf16.msra.mxu0 0
      %678 = vmatprep.subr.bf16.mxu0 0
      %679 = vmatpush1.bf16.msra.mxu0 0
      %680 = vmatprep.subr.bf16.mxu0 0
      %681 = vmatpush1.bf16.msra.mxu0 %v659
      %682 = vmatprep.subr.bf16.mxu0 0
      %683 = vmatpush1.bf16.msra.mxu0 %v658
      %684 = vmatprep.subr.bf16.mxu0 0
      %685 = vmatpush2.bf16.msra.mxu0 0
      %686 = vmatprep.subr.bf16.mxu0 0
      %687 = vmatpush2.bf16.msra.mxu0 0
      %688 = vmatprep.subr.bf16.mxu0 0
      %689 = vmatpush2.bf16.msra.mxu0 0
      %690 = vmatprep.subr.bf16.mxu0 0
      %691 = vmatpush2.bf16.msra.mxu0 0
      %692 = vmatprep.subr.bf16.mxu0 0
      %693 = vmatpush2.bf16.msra.mxu0 0
      %694 = vmatprep.subr.bf16.mxu0 0
      %695 = vmatpush2.bf16.msra.mxu0 0
      %696 = vmatprep.subr.bf16.mxu0 0
      %697 = vmatpush2.bf16.msra.mxu0 0
      %698 = vmatprep.subr.bf16.mxu0 0
      %699 = vmatpush2.bf16.msra.mxu0 0
      %700 = vmatprep.mubr.bf16.mxu0 0
      %701 = vmatmul.mubr.bf16.gmra.mxu0 %v666
      %v702 = vpop.f32.mrf.mxu0
      %v703 = vadd.f32 0.0, %v702
      %v704 = vpop.f32.mrf.mxu0
      %v705 = vpop.f32.mrf.mxu0
      %v706 = vadd.f32 0.0, %v705
      %v707 = vpop.f32.mrf.mxu0
      %708 = vdwg.mxu0
      %v709 = vpack.c.bf16 %v706, %v703
      %s710 = scalar_lea.vmem %s3, 40
      %v711 = vld [vmem:[%s710] sm:$0xff]
      %v712 = vld [vmem:[%s710 + $0x8] sm:$0xff]
      %v713 = vld [vmem:[%s710 + $0x10] sm:$0xff]
      %v714 = vld [vmem:[%s710 + $0x18] sm:$0xff]
      %v715 = vld [vmem:[%s710 + $0x20] sm:$0x33]
      %s716 = scalar_lea.vmem %s4, 16
      %v717 = vld [vmem:[%s716] sm:$0xff]
      %v718 = vld [vmem:[%s716 + $0x8] sm:$0xff]
      %720 = vset.pattern.permute.xlu0 0
      %721 = vperm.xlu0 %720, %v717
      %v722 = vpop.permute.xlu0 %721
      %725 = vset.pattern.permute.xlu0 0
      %726 = vperm.xlu0 %725, %v718
      %v727 = vpop.permute.xlu0 %726
      %v734 = vunpack.c.l.b16 %v711
      %v735 = vunpack.c.h.b16 %v711
      %v736 = vunpack.c.l.b16 %v712
      %v737 = vunpack.c.h.b16 %v712
      %v738 = vunpack.c.l.b16 %v713
      %v739 = vunpack.c.h.b16 %v713
      %v740 = vunpack.c.l.b16 %v714
      %v741 = vunpack.c.h.b16 %v714
      %v742 = vunpack.c.l.b16 %v715
      %v743 = vunpack.c.h.b16 %v715
      %v744 = vpack.c.b16 %v736, %v734
      %v745 = vpack.c.b16 %v737, %v735
      %v746 = vpack.c.b16 %v740, %v738
      %v747 = vpack.c.b16 %v741, %v739
      %v748 = vpack.c.b16 %v742, %v742
      %v749 = vpack.c.b16 %v743, %v743
      %v755 = vsel %vm471, %v709, 0
      %v758 = vsel %vm475, %v748, 0
      %v761 = vsel %vm475, %v749, 0
      %763 = vmatprep.subr.bf16.mxu0 0
      %764 = vmatpush1.bf16.msra.mxu0 0
      %765 = vmatprep.subr.bf16.mxu0 0
      %766 = vmatpush1.bf16.msra.mxu0 0
      %767 = vmatprep.subr.bf16.mxu0 0
      %768 = vmatpush1.bf16.msra.mxu0 0
      %769 = vmatprep.subr.bf16.mxu0 0
      %770 = vmatpush1.bf16.msra.mxu0 0
      %771 = vmatprep.subr.bf16.mxu0 0
      %772 = vmatpush1.bf16.msra.mxu0 0
      %773 = vmatprep.subr.bf16.mxu0 %v761
      %774 = vmatpush1.bf16.msra.mxu0 %v758
      %775 = vmatprep.subr.bf16.mxu0 %v747
      %776 = vmatpush1.bf16.msra.mxu0 %v746
      %777 = vmatprep.subr.bf16.mxu0 %v745
      %778 = vmatpush1.bf16.msra.mxu0 %v744
      %779 = vmatprep.subr.bf16.mxu0 0
      %780 = vmatpush2.bf16.msra.mxu0 0
      %781 = vmatprep.subr.bf16.mxu0 0
      %782 = vmatpush2.bf16.msra.mxu0 0
      %783 = vmatprep.subr.bf16.mxu0 0
      %784 = vmatpush2.bf16.msra.mxu0 0
      %785 = vmatprep.subr.bf16.mxu0 0
      %786 = vmatpush2.bf16.msra.mxu0 0
      %787 = vmatprep.subr.bf16.mxu0 0
      %788 = vmatpush2.bf16.msra.mxu0 0
      %789 = vmatprep.subr.bf16.mxu0 0
      %790 = vmatpush2.bf16.msra.mxu0 0
      %791 = vmatprep.subr.bf16.mxu0 0
      %792 = vmatpush2.bf16.msra.mxu0 0
      %793 = vmatprep.subr.bf16.mxu0 0
      %794 = vmatpush2.bf16.msra.mxu0 0
      %795 = vmatprep.mubr.bf16.mxu0 0
      %796 = vmatmul.mubr.bf16.gmra.mxu0 %v755
      %v797 = vpop.f32.mrf.mxu0
      %v798 = vadd.f32 %v722, %v797
      %v799 = vpop.f32.mrf.mxu0
      %v800 = vadd.f32 %v722, %v799
      %v801 = vpop.f32.mrf.mxu0
      %v802 = vadd.f32 %v727, %v801
      %v803 = vpop.f32.mrf.mxu0
      %v804 = vadd.f32 %v727, %v803
      %805 = vdwg.mxu0
      %v806 = vmax.f32 %v798, 0.0
      %v807 = vmax.f32 %v800, 0.0
      %v808 = vmax.f32 %v802, 0.0
      %v809 = vmax.f32 %v804, 0.0
      %810 = vst [vmem:[%s224 + $0x60] sm:$0xff] %v806
      %811 = vst.msk [vmem:[%s224 + $0x68] sm:$0xff] %vm235, %v807
      %812 = vst [vmem:[%s224 + $0x70] sm:$0xff] %v808
      %813 = vst.msk [vmem:[%s224 + $0x78] sm:$0xff] %vm235, %v809
      %s814 = scalar_lea.vmem %s1, 144
      %v815 = vld [vmem:[%s814] sm:$0xf]
      %v816 = vld [vmem:[%s814 + $0x4] sm:$0xf]
      %v817 = vld [vmem:[%s814 + $0x8] sm:$0xf]
      %v818 = vld [vmem:[%s814 + $0xc] sm:$0xf]
      %v819 = vld [vmem:[%s814 + $0x10] sm:$0xf]
      %v820 = vld [vmem:[%s814 + $0x14] sm:$0xf]
      %v821 = vld [vmem:[%s814 + $0x18] sm:$0xf]
      %v822 = vld [vmem:[%s814 + $0x1c] sm:$0xf]
      %v823 = vld [vmem:[%s814 + $0x20] sm:$0xf]
      %v824 = vld [vmem:[%s814 + $0x24] sm:$0xf]
      %v825 = vld [vmem:[%s814 + $0x28] sm:$0xf]
      %v826 = vld [vmem:[%s814 + $0x2c] sm:$0xf]
      %v827 = vld [vmem:[%s814 + $0x30] sm:$0xf]
      %v828 = vld [vmem:[%s814 + $0x34] sm:$0xf]
      %v829 = vld [vmem:[%s814 + $0x38] sm:$0xf]
      %v830 = vld [vmem:[%s814 + $0x3c] sm:$0xf]
      %v831 = vld [vmem:[%s814 + $0x40] sm:$0xf]
      %v832 = vld [vmem:[%s814 + $0x44] sm:$0xf]
      %v851 = vunpack.c.l.b16 %v815
      %v852 = vunpack.c.l.b16 %v816
      %v853 = vunpack.c.l.b16 %v817
      %v854 = vunpack.c.l.b16 %v818
      %v855 = vunpack.c.l.b16 %v819
      %v856 = vunpack.c.l.b16 %v820
      %v857 = vunpack.c.l.b16 %v821
      %v858 = vunpack.c.l.b16 %v822
      %v859 = vunpack.c.l.b16 %v823
      %v860 = vunpack.c.l.b16 %v824
      %v861 = vunpack.c.l.b16 %v825
      %v862 = vunpack.c.l.b16 %v826
      %v863 = vunpack.c.l.b16 %v827
      %v864 = vunpack.c.l.b16 %v828
      %v865 = vunpack.c.l.b16 %v829
      %v866 = vunpack.c.l.b16 %v830
      %v867 = vunpack.c.l.b16 %v831
      %v868 = vunpack.c.l.b16 %v832
      %v869 = vpack.c.b16 %v852, %v851
      %v870 = vpack.c.b16 %v854, %v853
      %v871 = vpack.c.b16 %v856, %v855
      %v872 = vpack.c.b16 %v858, %v857
      %v873 = vpack.c.b16 %v860, %v859
      %v874 = vpack.c.b16 %v862, %v861
      %v875 = vpack.c.b16 %v864, %v863
      %v876 = vpack.c.b16 %v866, %v865
      %v877 = vpack.c.b16 %v868, %v867
      %887 = vmatprep.subr.bf16.mxu0 0
      %888 = vmatpush1.bf16.msra.mxu0 %v876
      %889 = vmatprep.subr.bf16.mxu0 0
      %890 = vmatpush1.bf16.msra.mxu0 %v875
      %891 = vmatprep.subr.bf16.mxu0 0
      %892 = vmatpush1.bf16.msra.mxu0 %v874
      %893 = vmatprep.subr.bf16.mxu0 0
      %894 = vmatpush1.bf16.msra.mxu0 %v873
      %895 = vmatprep.subr.bf16.mxu0 0
      %896 = vmatpush1.bf16.msra.mxu0 %v872
      %897 = vmatprep.subr.bf16.mxu0 0
      %898 = vmatpush1.bf16.msra.mxu0 %v871
      %899 = vmatprep.subr.bf16.mxu0 0
      %900 = vmatpush1.bf16.msra.mxu0 %v870
      %901 = vmatprep.subr.bf16.mxu0 0
      %902 = vmatpush1.bf16.msra.mxu0 %v869
      %903 = vmatprep.subr.bf16.mxu0 0
      %904 = vmatpush2.bf16.msra.mxu0 0
      %905 = vmatprep.subr.bf16.mxu0 0
      %906 = vmatpush2.bf16.msra.mxu0 0
      %907 = vmatprep.subr.bf16.mxu0 0
      %908 = vmatpush2.bf16.msra.mxu0 0
      %909 = vmatprep.subr.bf16.mxu0 0
      %910 = vmatpush2.bf16.msra.mxu0 0
      %911 = vmatprep.subr.bf16.mxu0 0
      %912 = vmatpush2.bf16.msra.mxu0 0
      %913 = vmatprep.subr.bf16.mxu0 0
      %914 = vmatpush2.bf16.msra.mxu0 0
      %915 = vmatprep.subr.bf16.mxu0 0
      %916 = vmatpush2.bf16.msra.mxu0 0
      %917 = vmatprep.subr.bf16.mxu0 0
      %918 = vmatpush2.bf16.msra.mxu0 %v877
      %919 = vmatprep.mubr.bf16.mxu0 %v320
      %920 = vmatmul.mubr.bf16.gmra.mxu0 %v243
      %v921 = vpop.f32.mrf.mxu0
      %v922 = vadd.f32 0.0, %v921
      %v923 = vpop.f32.mrf.mxu0
      %v924 = vpop.f32.mrf.mxu0
      %v925 = vadd.f32 0.0, %v924
      %v926 = vpop.f32.mrf.mxu0
      %927 = vmatprep.mubr.bf16.mxu0 %v323
      %928 = vmatmul.mubr.bf16.gmra.mxu0 %v245
      %v929 = vpop.f32.mrf.mxu0
      %v930 = vadd.f32 0.0, %v929
      %v931 = vpop.f32.mrf.mxu0
      %v932 = vpop.f32.mrf.mxu0
      %v933 = vadd.f32 0.0, %v932
      %v934 = vpop.f32.mrf.mxu0
      %935 = vdwg.mxu0
      %s936 = scalar_lea.vmem %s2, 16
      %v937 = vld [vmem:[%s936] sm:$0xf]
      %v938 = vld [vmem:[%s936 + $0x4] sm:$0xf]
      %v939 = vpack.c.bf16 %v925, %v922
      %v940 = vpack.c.bf16 %v933, %v930
      %v943 = vunpack.c.l.b16 %v937
      %v944 = vunpack.c.l.b16 %v938
      %v945 = vpack.c.b16 %v944, %v943
      %v947 = vsel %vm383, %v945, 0
      %949 = vmatprep.subr.bf16.mxu0 0
      %950 = vmatpush1.bf16.msra.mxu0 0
      %951 = vmatprep.subr.bf16.mxu0 0
      %952 = vmatpush1.bf16.msra.mxu0 0
      %953 = vmatprep.subr.bf16.mxu0 0
      %954 = vmatpush1.bf16.msra.mxu0 0
      %955 = vmatprep.subr.bf16.mxu0 0
      %956 = vmatpush1.bf16.msra.mxu0 0
      %957 = vmatprep.subr.bf16.mxu0 0
      %958 = vmatpush1.bf16.msra.mxu0 0
      %959 = vmatprep.subr.bf16.mxu0 0
      %960 = vmatpush1.bf16.msra.mxu0 0
      %961 = vmatprep.subr.bf16.mxu0 0
      %962 = vmatpush1.bf16.msra.mxu0 %v940
      %963 = vmatprep.subr.bf16.mxu0 0
      %964 = vmatpush1.bf16.msra.mxu0 %v939
      %965 = vmatprep.subr.bf16.mxu0 0
      %966 = vmatpush2.bf16.msra.mxu0 0
      %967 = vmatprep.subr.bf16.mxu0 0
      %968 = vmatpush2.bf16.msra.mxu0 0
      %969 = vmatprep.subr.bf16.mxu0 0
      %970 = vmatpush2.bf16.msra.mxu0 0
      %971 = vmatprep.subr.bf16.mxu0 0
      %972 = vmatpush2.bf16.msra.mxu0 0
      %973 = vmatprep.subr.bf16.mxu0 0
      %974 = vmatpush2.bf16.msra.mxu0 0
      %975 = vmatprep.subr.bf16.mxu0 0
      %976 = vmatpush2.bf16.msra.mxu0 0
      %977 = vmatprep.subr.bf16.mxu0 0
      %978 = vmatpush2.bf16.msra.mxu0 0
      %979 = vmatprep.subr.bf16.mxu0 0
      %980 = vmatpush2.bf16.msra.mxu0 0
      %981 = vmatprep.mubr.bf16.mxu0 0
      %982 = vmatmul.mubr.bf16.gmra.mxu0 %v947
      %v983 = vpop.f32.mrf.mxu0
      %v984 = vadd.f32 0.0, %v983
      %v985 = vpop.f32.mrf.mxu0
      %v986 = vpop.f32.mrf.mxu0
      %v987 = vadd.f32 0.0, %v986
      %v988 = vpop.f32.mrf.mxu0
      %989 = vdwg.mxu0
      %v990 = vpack.c.bf16 %v987, %v984
      %s991 = scalar_lea.vmem %s3, 80
      %v992 = vld [vmem:[%s991] sm:$0xff]
      %v993 = vld [vmem:[%s991 + $0x8] sm:$0xff]
      %v994 = vld [vmem:[%s991 + $0x10] sm:$0xff]
      %v995 = vld [vmem:[%s991 + $0x18] sm:$0xff]
      %v996 = vld [vmem:[%s991 + $0x20] sm:$0x33]
      %s997 = scalar_lea.vmem %s4, 32
      %v998 = vld [vmem:[%s997] sm:$0xff]
      %v999 = vld [vmem:[%s997 + $0x8] sm:$0xff]
      %1001 = vset.pattern.permute.xlu0 0
      %1002 = vperm.xlu0 %1001, %v998
      %v1003 = vpop.permute.xlu0 %1002
      %1006 = vset.pattern.permute.xlu0 0
      %1007 = vperm.xlu0 %1006, %v999
      %v1008 = vpop.permute.xlu0 %1007
      %v1015 = vunpack.c.l.b16 %v992
      %v1016 = vunpack.c.h.b16 %v992
      %v1017 = vunpack.c.l.b16 %v993
      %v1018 = vunpack.c.h.b16 %v993
      %v1019 = vunpack.c.l.b16 %v994
      %v1020 = vunpack.c.h.b16 %v994
      %v1021 = vunpack.c.l.b16 %v995
      %v1022 = vunpack.c.h.b16 %v995
      %v1023 = vunpack.c.l.b16 %v996
      %v1024 = vunpack.c.h.b16 %v996
      %v1025 = vpack.c.b16 %v1017, %v1015
      %v1026 = vpack.c.b16 %v1018, %v1016
      %v1027 = vpack.c.b16 %v1021, %v1019
      %v1028 = vpack.c.b16 %v1022, %v1020
      %v1029 = vpack.c.b16 %v1023, %v1023
      %v1030 = vpack.c.b16 %v1024, %v1024
      %v1036 = vsel %vm471, %v990, 0
      %v1039 = vsel %vm475, %v1029, 0
      %v1042 = vsel %vm475, %v1030, 0
      %1044 = vmatprep.subr.bf16.mxu0 0
      %1045 = vmatpush1.bf16.msra.mxu0 0
      %1046 = vmatprep.subr.bf16.mxu0 0
      %1047 = vmatpush1.bf16.msra.mxu0 0
      %1048 = vmatprep.subr.bf16.mxu0 0
      %1049 = vmatpush1.bf16.msra.mxu0 0
      %1050 = vmatprep.subr.bf16.mxu0 0
      %1051 = vmatpush1.bf16.msra.mxu0 0
      %1052 = vmatprep.subr.bf16.mxu0 0
      %1053 = vmatpush1.bf16.msra.mxu0 0
      %1054 = vmatprep.subr.bf16.mxu0 %v1042
      %1055 = vmatpush1.bf16.msra.mxu0 %v1039
      %1056 = vmatprep.subr.bf16.mxu0 %v1028
      %1057 = vmatpush1.bf16.msra.mxu0 %v1027
      %1058 = vmatprep.subr.bf16.mxu0 %v1026
      %1059 = vmatpush1.bf16.msra.mxu0 %v1025
      %1060 = vmatprep.subr.bf16.mxu0 0
      %1061 = vmatpush2.bf16.msra.mxu0 0
      %1062 = vmatprep.subr.bf16.mxu0 0
      %1063 = vmatpush2.bf16.msra.mxu0 0
      %1064 = vmatprep.subr.bf16.mxu0 0
      %1065 = vmatpush2.bf16.msra.mxu0 0
      %1066 = vmatprep.subr.bf16.mxu0 0
      %1067 = vmatpush2.bf16.msra.mxu0 0
      %1068 = vmatprep.subr.bf16.mxu0 0
      %1069 = vmatpush2.bf16.msra.mxu0 0
      %1070 = vmatprep.subr.bf16.mxu0 0
      %1071 = vmatpush2.bf16.msra.mxu0 0
      %1072 = vmatprep.subr.bf16.mxu0 0
      %1073 = vmatpush2.bf16.msra.mxu0 0
      %1074 = vmatprep.subr.bf16.mxu0 0
      %1075 = vmatpush2.bf16.msra.mxu0 0
      %1076 = vmatprep.mubr.bf16.mxu0 0
      %1077 = vmatmul.mubr.bf16.gmra.mxu0 %v1036
      %v1078 = vpop.f32.mrf.mxu0
      %v1079 = vadd.f32 %v1003, %v1078
      %v1080 = vpop.f32.mrf.mxu0
      %v1081 = vadd.f32 %v1003, %v1080
      %v1082 = vpop.f32.mrf.mxu0
      %v1083 = vadd.f32 %v1008, %v1082
      %v1084 = vpop.f32.mrf.mxu0
      %v1085 = vadd.f32 %v1008, %v1084
      %1086 = vdwg.mxu0
      %v1087 = vmax.f32 %v1079, 0.0
      %v1088 = vmax.f32 %v1081, 0.0
      %v1089 = vmax.f32 %v1083, 0.0
      %v1090 = vmax.f32 %v1085, 0.0
      %1091 = vst [vmem:[%s224 + $0x80] sm:$0xff] %v1087
      %1092 = vst.msk [vmem:[%s224 + $0x88] sm:$0xff] %vm235, %v1088
      %1093 = vst [vmem:[%s224 + $0x90] sm:$0xff] %v1089
      %1094 = vst.msk [vmem:[%s224 + $0x98] sm:$0xff] %vm235, %v1090
      %s1095 = scalar_lea.vmem %s1, 216
      %v1096 = vld [vmem:[%s1095] sm:$0xf]
      %v1097 = vld [vmem:[%s1095 + $0x4] sm:$0xf]
      %v1098 = vld [vmem:[%s1095 + $0x8] sm:$0xf]
      %v1099 = vld [vmem:[%s1095 + $0xc] sm:$0xf]
      %v1100 = vld [vmem:[%s1095 + $0x10] sm:$0xf]
      %v1101 = vld [vmem:[%s1095 + $0x14] sm:$0xf]
      %v1102 = vld [vmem:[%s1095 + $0x18] sm:$0xf]
      %v1103 = vld [vmem:[%s1095 + $0x1c] sm:$0xf]
      %v1104 = vld [vmem:[%s1095 + $0x20] sm:$0xf]
      %v1105 = vld [vmem:[%s1095 + $0x24] sm:$0xf]
      %v1106 = vld [vmem:[%s1095 + $0x28] sm:$0xf]
      %v1107 = vld [vmem:[%s1095 + $0x2c] sm:$0xf]
      %v1108 = vld [vmem:[%s1095 + $0x30] sm:$0xf]
      %v1109 = vld [vmem:[%s1095 + $0x34] sm:$0xf]
      %v1110 = vld [vmem:[%s1095 + $0x38] sm:$0xf]
      %v1111 = vld [vmem:[%s1095 + $0x3c] sm:$0xf]
      %v1112 = vld [vmem:[%s1095 + $0x40] sm:$0xf]
      %v1113 = vld [vmem:[%s1095 + $0x44] sm:$0xf]
      %v1132 = vunpack.c.l.b16 %v1096
      %v1133 = vunpack.c.l.b16 %v1097
      %v1134 = vunpack.c.l.b16 %v1098
      %v1135 = vunpack.c.l.b16 %v1099
      %v1136 = vunpack.c.l.b16 %v1100
      %v1137 = vunpack.c.l.b16 %v1101
      %v1138 = vunpack.c.l.b16 %v1102
      %v1139 = vunpack.c.l.b16 %v1103
      %v1140 = vunpack.c.l.b16 %v1104
      %v1141 = vunpack.c.l.b16 %v1105
      %v1142 = vunpack.c.l.b16 %v1106
      %v1143 = vunpack.c.l.b16 %v1107
      %v1144 = vunpack.c.l.b16 %v1108
      %v1145 = vunpack.c.l.b16 %v1109
      %v1146 = vunpack.c.l.b16 %v1110
      %v1147 = vunpack.c.l.b16 %v1111
      %v1148 = vunpack.c.l.b16 %v1112
      %v1149 = vunpack.c.l.b16 %v1113
      %v1150 = vpack.c.b16 %v1133, %v1132
      %v1151 = vpack.c.b16 %v1135, %v1134
      %v1152 = vpack.c.b16 %v1137, %v1136
      %v1153 = vpack.c.b16 %v1139, %v1138
      %v1154 = vpack.c.b16 %v1141, %v1140
      %v1155 = vpack.c.b16 %v1143, %v1142
      %v1156 = vpack.c.b16 %v1145, %v1144
      %v1157 = vpack.c.b16 %v1147, %v1146
      %v1158 = vpack.c.b16 %v1149, %v1148
      %1168 = vmatprep.subr.bf16.mxu0 0
      %1169 = vmatpush1.bf16.msra.mxu0 %v1157
      %1170 = vmatprep.subr.bf16.mxu0 0
      %1171 = vmatpush1.bf16.msra.mxu0 %v1156
      %1172 = vmatprep.subr.bf16.mxu0 0
      %1173 = vmatpush1.bf16.msra.mxu0 %v1155
      %1174 = vmatprep.subr.bf16.mxu0 0
      %1175 = vmatpush1.bf16.msra.mxu0 %v1154
      %1176 = vmatprep.subr.bf16.mxu0 0
      %1177 = vmatpush1.bf16.msra.mxu0 %v1153
      %1178 = vmatprep.subr.bf16.mxu0 0
      %1179 = vmatpush1.bf16.msra.mxu0 %v1152
      %1180 = vmatprep.subr.bf16.mxu0 0
      %1181 = vmatpush1.bf16.msra.mxu0 %v1151
      %1182 = vmatprep.subr.bf16.mxu0 0
      %1183 = vmatpush1.bf16.msra.mxu0 %v1150
      %1184 = vmatprep.subr.bf16.mxu0 0
      %1185 = vmatpush2.bf16.msra.mxu0 0
      %1186 = vmatprep.subr.bf16.mxu0 0
      %1187 = vmatpush2.bf16.msra.mxu0 0
      %1188 = vmatprep.subr.bf16.mxu0 0
      %1189 = vmatpush2.bf16.msra.mxu0 0
      %1190 = vmatprep.subr.bf16.mxu0 0
      %1191 = vmatpush2.bf16.msra.mxu0 0
      %1192 = vmatprep.subr.bf16.mxu0 0
      %1193 = vmatpush2.bf16.msra.mxu0 0
      %1194 = vmatprep.subr.bf16.mxu0 0
      %1195 = vmatpush2.bf16.msra.mxu0 0
      %1196 = vmatprep.subr.bf16.mxu0 0
      %1197 = vmatpush2.bf16.msra.mxu0 0
      %1198 = vmatprep.subr.bf16.mxu0 0
      %1199 = vmatpush2.bf16.msra.mxu0 %v1158
      %1200 = vmatprep.mubr.bf16.mxu0 %v320
      %1201 = vmatmul.mubr.bf16.gmra.mxu0 %v243
      %v1202 = vpop.f32.mrf.mxu0
      %v1203 = vadd.f32 0.0, %v1202
      %v1204 = vpop.f32.mrf.mxu0
      %v1205 = vpop.f32.mrf.mxu0
      %v1206 = vadd.f32 0.0, %v1205
      %v1207 = vpop.f32.mrf.mxu0
      %1208 = vmatprep.mubr.bf16.mxu0 %v323
      %1209 = vmatmul.mubr.bf16.gmra.mxu0 %v245
      %v1210 = vpop.f32.mrf.mxu0
      %v1211 = vadd.f32 0.0, %v1210
      %v1212 = vpop.f32.mrf.mxu0
      %v1213 = vpop.f32.mrf.mxu0
      %v1214 = vadd.f32 0.0, %v1213
      %v1215 = vpop.f32.mrf.mxu0
      %1216 = vdwg.mxu0
      %s1217 = scalar_lea.vmem %s2, 24
      %v1218 = vld [vmem:[%s1217] sm:$0xf]
      %v1219 = vld [vmem:[%s1217 + $0x4] sm:$0xf]
      %v1220 = vpack.c.bf16 %v1206, %v1203
      %v1221 = vpack.c.bf16 %v1214, %v1211
      %v1224 = vunpack.c.l.b16 %v1218
      %v1225 = vunpack.c.l.b16 %v1219
      %v1226 = vpack.c.b16 %v1225, %v1224
      %v1228 = vsel %vm383, %v1226, 0
      %1230 = vmatprep.subr.bf16.mxu0 0
      %1231 = vmatpush1.bf16.msra.mxu0 0
      %1232 = vmatprep.subr.bf16.mxu0 0
      %1233 = vmatpush1.bf16.msra.mxu0 0
      %1234 = vmatprep.subr.bf16.mxu0 0
      %1235 = vmatpush1.bf16.msra.mxu0 0
      %1236 = vmatprep.subr.bf16.mxu0 0
      %1237 = vmatpush1.bf16.msra.mxu0 0
      %1238 = vmatprep.subr.bf16.mxu0 0
      %1239 = vmatpush1.bf16.msra.mxu0 0
      %1240 = vmatprep.subr.bf16.mxu0 0
      %1241 = vmatpush1.bf16.msra.mxu0 0
      %1242 = vmatprep.subr.bf16.mxu0 0
      %1243 = vmatpush1.bf16.msra.mxu0 %v1221
      %1244 = vmatprep.subr.bf16.mxu0 0
      %1245 = vmatpush1.bf16.msra.mxu0 %v1220
      %1246 = vmatprep.subr.bf16.mxu0 0
      %1247 = vmatpush2.bf16.msra.mxu0 0
      %1248 = vmatprep.subr.bf16.mxu0 0
      %1249 = vmatpush2.bf16.msra.mxu0 0
      %1250 = vmatprep.subr.bf16.mxu0 0
      %1251 = vmatpush2.bf16.msra.mxu0 0
      %1252 = vmatprep.subr.bf16.mxu0 0
      %1253 = vmatpush2.bf16.msra.mxu0 0
      %1254 = vmatprep.subr.bf16.mxu0 0
      %1255 = vmatpush2.bf16.msra.mxu0 0
      %1256 = vmatprep.subr.bf16.mxu0 0
      %1257 = vmatpush2.bf16.msra.mxu0 0
      %1258 = vmatprep.subr.bf16.mxu0 0
      %1259 = vmatpush2.bf16.msra.mxu0 0
      %1260 = vmatprep.subr.bf16.mxu0 0
      %1261 = vmatpush2.bf16.msra.mxu0 0
      %1262 = vmatprep.mubr.bf16.mxu0 0
      %1263 = vmatmul.mubr.bf16.gmra.mxu0 %v1228
      %v1264 = vpop.f32.mrf.mxu0
      %v1265 = vadd.f32 0.0, %v1264
      %v1266 = vpop.f32.mrf.mxu0
      %v1267 = vpop.f32.mrf.mxu0
      %v1268 = vadd.f32 0.0, %v1267
      %v1269 = vpop.f32.mrf.mxu0
      %1270 = vdwg.mxu0
      %v1271 = vpack.c.bf16 %v1268, %v1265
      %s1272 = scalar_lea.vmem %s3, 120
      %v1273 = vld [vmem:[%s1272] sm:$0xff]
      %v1274 = vld [vmem:[%s1272 + $0x8] sm:$0xff]
      %v1275 = vld [vmem:[%s1272 + $0x10] sm:$0xff]
      %v1276 = vld [vmem:[%s1272 + $0x18] sm:$0xff]
      %v1277 = vld [vmem:[%s1272 + $0x20] sm:$0x33]
      %s1278 = scalar_lea.vmem %s4, 48
      %v1279 = vld [vmem:[%s1278] sm:$0xff]
      %v1280 = vld [vmem:[%s1278 + $0x8] sm:$0xff]
      %1282 = vset.pattern.permute.xlu0 0
      %1283 = vperm.xlu0 %1282, %v1279
      %v1284 = vpop.permute.xlu0 %1283
      %1287 = vset.pattern.permute.xlu0 0
      %1288 = vperm.xlu0 %1287, %v1280
      %v1289 = vpop.permute.xlu0 %1288
      %v1296 = vunpack.c.l.b16 %v1273
      %v1297 = vunpack.c.h.b16 %v1273
      %v1298 = vunpack.c.l.b16 %v1274
      %v1299 = vunpack.c.h.b16 %v1274
      %v1300 = vunpack.c.l.b16 %v1275
      %v1301 = vunpack.c.h.b16 %v1275
      %v1302 = vunpack.c.l.b16 %v1276
      %v1303 = vunpack.c.h.b16 %v1276
      %v1304 = vunpack.c.l.b16 %v1277
      %v1305 = vunpack.c.h.b16 %v1277
      %v1306 = vpack.c.b16 %v1298, %v1296
      %v1307 = vpack.c.b16 %v1299, %v1297
      %v1308 = vpack.c.b16 %v1302, %v1300
      %v1309 = vpack.c.b16 %v1303, %v1301
      %v1310 = vpack.c.b16 %v1304, %v1304
      %v1311 = vpack.c.b16 %v1305, %v1305
      %v1317 = vsel %vm471, %v1271, 0
      %v1320 = vsel %vm475, %v1310, 0
      %v1323 = vsel %vm475, %v1311, 0
      %1325 = vmatprep.subr.bf16.mxu0 0
      %1326 = vmatpush1.bf16.msra.mxu0 0
      %1327 = vmatprep.subr.bf16.mxu0 0
      %1328 = vmatpush1.bf16.msra.mxu0 0
      %1329 = vmatprep.subr.bf16.mxu0 0
      %1330 = vmatpush1.bf16.msra.mxu0 0
      %1331 = vmatprep.subr.bf16.mxu0 0
      %1332 = vmatpush1.bf16.msra.mxu0 0
      %1333 = vmatprep.subr.bf16.mxu0 0
      %1334 = vmatpush1.bf16.msra.mxu0 0
      %1335 = vmatprep.subr.bf16.mxu0 %v1323
      %1336 = vmatpush1.bf16.msra.mxu0 %v1320
      %1337 = vmatprep.subr.bf16.mxu0 %v1309
      %1338 = vmatpush1.bf16.msra.mxu0 %v1308
      %1339 = vmatprep.subr.bf16.mxu0 %v1307
      %1340 = vmatpush1.bf16.msra.mxu0 %v1306
      %1341 = vmatprep.subr.bf16.mxu0 0
      %1342 = vmatpush2.bf16.msra.mxu0 0
      %1343 = vmatprep.subr.bf16.mxu0 0
      %1344 = vmatpush2.bf16.msra.mxu0 0
      %1345 = vmatprep.subr.bf16.mxu0 0
      %1346 = vmatpush2.bf16.msra.mxu0 0
      %1347 = vmatprep.subr.bf16.mxu0 0
      %1348 = vmatpush2.bf16.msra.mxu0 0
      %1349 = vmatprep.subr.bf16.mxu0 0
      %1350 = vmatpush2.bf16.msra.mxu0 0
      %1351 = vmatprep.subr.bf16.mxu0 0
      %1352 = vmatpush2.bf16.msra.mxu0 0
      %1353 = vmatprep.subr.bf16.mxu0 0
      %1354 = vmatpush2.bf16.msra.mxu0 0
      %1355 = vmatprep.subr.bf16.mxu0 0
      %1356 = vmatpush2.bf16.msra.mxu0 0
      %1357 = vmatprep.mubr.bf16.mxu0 0
      %1358 = vmatmul.mubr.bf16.gmra.mxu0 %v1317
      %v1359 = vpop.f32.mrf.mxu0
      %v1360 = vadd.f32 %v1284, %v1359
      %v1361 = vpop.f32.mrf.mxu0
      %v1362 = vadd.f32 %v1284, %v1361
      %v1363 = vpop.f32.mrf.mxu0
      %v1364 = vadd.f32 %v1289, %v1363
      %v1365 = vpop.f32.mrf.mxu0
      %v1366 = vadd.f32 %v1289, %v1365
      %1367 = vdwg.mxu0
      %v1368 = vmax.f32 %v1360, 0.0
      %v1369 = vmax.f32 %v1362, 0.0
      %v1370 = vmax.f32 %v1364, 0.0
      %v1371 = vmax.f32 %v1366, 0.0
      %1372 = vst [vmem:[%s224 + $0xa0] sm:$0xff] %v1368
      %1373 = vst.msk [vmem:[%s224 + $0xa8] sm:$0xff] %vm235, %v1369
      %1374 = vst [vmem:[%s224 + $0xb0] sm:$0xff] %v1370
      %1375 = vst.msk [vmem:[%s224 + $0xb8] sm:$0xff] %vm235, %v1371
      %p1376 = scmp.lt.s32.totalorder %s16, 1
      %s1377 = scalar_select %p1376, %s16, 1
      %s1378 = smul.addr %s1377, 24
      %s1379 = smul.addr %s1378, 8
      %s1380 = scalar_lea.vmem %s5, %s1379
      // Predicated region
      $region41: #{tpu_custom_call.1} parent=39 // pred_check
        %p1381 = pneg %p144
      $region42: #{tpu_custom_call.1} parent=39 // pred_check_branch
        %1383 = sbr.rel (%p1381) target = $region44
      $region43: #{tpu_custom_call.1} parent=39 // pred_region
        _
      $region44: #{tpu_custom_call.1} parent=39 // pred_fallthru
        _
    $region40: #{tpu_custom_call.1} parent=5 // pred_fallthru
      _
    %p1384 = scmp.le.s32.totalorder 2, %s11
    // Predicated region
    $region45: #{tpu_custom_call.1} parent=5 // pred_check
      %p1385 = pneg %p1384
    $region46: #{tpu_custom_call.1} parent=5 // pred_check_branch
      %1387 = sbr.rel (%p1385) target = $region48
    $region47: #{tpu_custom_call.1} parent=5 // pred_region
      %s1388 = ssub.s32 %s11, 2
      // Predicated region
      $region49: #{tpu_custom_call.1} parent=47 // pred_check
        %p1389 = pneg %p150
      $region50: #{tpu_custom_call.1} parent=47 // pred_check_branch
        %1391 = sbr.rel (%p1389) target = $region52
      $region51: #{tpu_custom_call.1} parent=47 // pred_region
        %p1392 = scmp.lt.s32.totalorder %s17, 1
        %s1393 = scalar_select %p1392, %s17, 1
        %s1394 = smul.addr %s1393, 24
        %s1395 = smul.addr %s1394, 8
        %s1396 = scalar_lea.vmem %s5, %s1395
      $region52: #{tpu_custom_call.1} parent=47 // pred_fallthru
        _
    $region48: #{tpu_custom_call.1} parent=5 // pred_fallthru
      _
  $region6: #{tpu_custom_call.1} parent=0 // loop_footer
    %s15 = sadd.s32 1, %s11
  $region7: #{tpu_custom_call.1} parent=0 // loop_footer_branch
    %10 = sbr.rel target = $region3
  $region8: #{tpu_custom_call.1} parent=0 // loop_exit
    _

</llo_original>
